<compile_context>
chip_gen: v6e
topology: v6e:2x2x1
jax: 0.10.0
libtpu: 0.0.40
codegen_flags: <defaults>
</compile_context>

<pallas_src>
import jax
import jax.numpy as jnp
import numpy as np
from jax.experimental import pallas as pl
from jax.experimental.pallas import tpu as pltpu


# -----------------------------------------------------------------------------
# Single fused kernel: LSTM recurrence (T unrolled) + pred MLP epilogue
# -----------------------------------------------------------------------------
def hipp_head_kernel(x_ref, w_ref, b_ref, w1_ref, b1_ref, w2_ref, b2_ref,
                     out_ref, xh_sc, c_sc):
    T, B, D = x_ref.shape
    H = c_sc.shape[1]

    # last_states is None (pass_states=None) -> zero init, PyTorch default.
    xh_sc[...] = jnp.zeros_like(xh_sc)      # [x_t | h_{t-1}] combined operand
    c_sc[...] = jnp.zeros_like(c_sc)

    w = w_ref[...]                          # (D+H, 4H) combined [W_ih; W_hh]^T
    b = b_ref[...]                          # (1, 4H)   b_ih + b_hh folded

    # Static unroll over the (small, compile-time) sequence length.
    for t in range(T):
        xh_sc[:, 0:D] = x_ref[t].astype(jnp.float32)          # x_t into front half
        # single combined gate matmul: (B, D+H) @ (D+H, 4H) -> (B, 4H)
        gates = jnp.dot(xh_sc[...], w,
                        preferred_element_type=jnp.float32) + b

        # Full-vreg nonlinearities (EUP), then slice the i/f/g/o quadrants.
        # PyTorch gate order: i, f, g, o.
        sig = jax.nn.sigmoid(gates)
        tnh = jnp.tanh(gates)
        i_g = sig[:, 0 * H:1 * H]
        f_g = sig[:, 1 * H:2 * H]
        g_g = tnh[:, 2 * H:3 * H]
        o_g = sig[:, 3 * H:4 * H]

        c_new = f_g * c_sc[...] + i_g * g_g
        h_new = o_g * jnp.tanh(c_new)

        c_sc[...] = c_new
        xh_sc[:, D:D + H] = h_new                              # h_t into back half

    # Fused pred_mlp(rnn_output[-1]): Linear -> ReLU -> Linear.
    h = xh_sc[:, D:D + H]                                      # (B, H) = h_{T-1}
    z = jnp.maximum(
        jnp.dot(h, w1_ref[...], preferred_element_type=jnp.float32) + b1_ref[...],
        0.0)
    y = jnp.dot(z, w2_ref[...], preferred_element_type=jnp.float32) + b2_ref[...]
    out_ref[...] = y.astype(out_ref.dtype)


def hipp_rnn_head_forward(input_embd, params):
    """input_embd: (T, B, D) sequence-first, as in nn.LSTM(batch_first=False).

    Returns pred_mlp(rnn_output[-1]) of shape (B, OUT).
    """
    T, B, D = input_embd.shape
    H = params["w_hh_t"].shape[0]
    M = params["w1_t"].shape[1]
    O = params["w2_t"].shape[1]

    # Combined gate weight: [W_ih^T ; W_hh^T] -> (D+H, 4H).
    w_comb = jnp.concatenate([params["w_ih_t"], params["w_hh_t"]], axis=0)

    return pl.pallas_call(
        hipp_head_kernel,
        out_shape=jax.ShapeDtypeStruct((B, O), jnp.float32),
        in_specs=[
            pl.BlockSpec((T, B, D), lambda: (0, 0, 0)),          # full sequence
            pl.BlockSpec((D + H, 4 * H), lambda: (0, 0)),        # combined LSTM W
            pl.BlockSpec((1, 4 * H), lambda: (0, 0)),            # folded LSTM bias
            pl.BlockSpec((H, M), lambda: (0, 0)),                # MLP W1^T
            pl.BlockSpec((1, M), lambda: (0, 0)),                # MLP b1
            pl.BlockSpec((M, O), lambda: (0, 0)),                # MLP W2^T
            pl.BlockSpec((1, O), lambda: (0, 0)),                # MLP b2
        ],
        out_specs=pl.BlockSpec((B, O), lambda: (0, 0)),
        scratch_shapes=[
            pltpu.VMEM((B, D + H), jnp.float32),                 # [x_t | h_{t-1}]
            pltpu.VMEM((B, H), jnp.float32),                     # cell state
        ],
    )(input_embd, w_comb, params["b_lstm"], params["w1_t"], params["b1"],
      params["w2_t"], params["b2"])


# -----------------------------------------------------------------------------
# Pure-JAX reference (for correctness check)
# -----------------------------------------------------------------------------
def reference_forward(input_embd, params):
    T, B, D = input_embd.shape
    H = params["w_hh_t"].shape[0]
    h = jnp.zeros((B, H), jnp.float32)
    c = jnp.zeros((B, H), jnp.float32)
    for t in range(T):
        gates = (input_embd[t] @ params["w_ih_t"]
                 + h @ params["w_hh_t"] + params["b_lstm"][0])
        i_g = jax.nn.sigmoid(gates[:, 0 * H:1 * H])
        f_g = jax.nn.sigmoid(gates[:, 1 * H:2 * H])
        g_g = jnp.tanh(gates[:, 2 * H:3 * H])
        o_g = jax.nn.sigmoid(gates[:, 3 * H:4 * H])
        c = f_g * c + i_g * g_g
        h = o_g * jnp.tanh(c)
    z = jnp.maximum(h @ params["w1_t"] + params["b1"][0], 0.0)
    return z @ params["w2_t"] + params["b2"][0]


if __name__ == "__main__":
    # Small shapes implied by the forward: seq=8, batch=8, input=32, hidden=32.
    T, B, D, H, M, OUT = 8, 8, 32, 32, 64, 32

    key = jax.random.PRNGKey(0)
    ks = jax.random.split(key, 8)
    s = 1.0 / np.sqrt(H)

    params = {
        # LSTM weights, stored pre-transposed for (x @ W) layout.
        "w_ih_t": jax.random.uniform(ks[0], (D, 4 * H), jnp.float32, -s, s),
        "w_hh_t": jax.random.uniform(ks[1], (H, 4 * H), jnp.float32, -s, s),
        # b_ih + b_hh folded into one bias, kept 2D for TPU layout.
        "b_lstm": jax.random.uniform(ks[2], (1, 4 * H), jnp.float32, -s, s),
        # pred_mlp: Linear(H->M) -> ReLU -> Linear(M->OUT)
        "w1_t": jax.random.uniform(ks[3], (H, M), jnp.float32, -s, s),
        "b1": jax.random.uniform(ks[4], (1, M), jnp.float32, -s, s),
        "w2_t": jax.random.uniform(ks[5], (M, OUT), jnp.float32, -s, s),
        "b2": jax.random.uniform(ks[6], (1, OUT), jnp.float32, -s, s),
    }

    input_embd = jax.random.normal(ks[7], (T, B, D), jnp.float32)

    out = hipp_rnn_head_forward(input_embd, params)
    out = jax.block_until_ready(out)

    ref = reference_forward(input_embd, params)
    np.testing.assert_allclose(np.asarray(out), np.asarray(ref),
                               rtol=1e-4, atol=1e-4)
    assert out.shape == (B, OUT)
    print("KERNEL_OK")
</pallas_src>

<mosaic_0001>
module attributes {stable_mosaic.version = 11 : i64} {
  func.func @hipp_head_kernel(%arg0: memref<8x8x32xf32, #tpu.memory_space<vmem>>, %arg1: memref<64x128xf32, #tpu.memory_space<vmem>>, %arg2: memref<1x128xf32, #tpu.memory_space<vmem>>, %arg3: memref<32x64xf32, #tpu.memory_space<vmem>>, %arg4: memref<1x64xf32, #tpu.memory_space<vmem>>, %arg5: memref<64x32xf32, #tpu.memory_space<vmem>>, %arg6: memref<1x32xf32, #tpu.memory_space<vmem>>, %arg7: memref<8x32xf32, #tpu.memory_space<vmem>>, %arg8: memref<8x64xf32, #tpu.memory_space<vmem>>, %arg9: memref<8x32xf32, #tpu.memory_space<vmem>>) attributes {dimension_semantics = [], scalar_prefetch = 0 : i64, scratch_operands = 2 : i64, tpu.core_type = #tpu.core_type<tc>} {
    %cst = arith.constant 0.000000e+00 : f32
    %0 = vector.broadcast %cst : f32 to vector<8x64xf32>
    %c0 = arith.constant 0 : index
    %c0_0 = arith.constant 0 : index
    %1 = vector.load %arg8[%c0, %c0_0] : memref<8x64xf32, #tpu.memory_space<vmem>>, vector<8x64xf32>
    tpu.vector_store %arg8[%c0, %c0_0], %0 {strides = array<i32>} : memref<8x64xf32, #tpu.memory_space<vmem>>, vector<8x64xf32>,
    %cst_1 = arith.constant 0.000000e+00 : f32
    %2 = vector.broadcast %cst_1 : f32 to vector<8x32xf32>
    %c0_2 = arith.constant 0 : index
    %c0_3 = arith.constant 0 : index
    %3 = vector.load %arg9[%c0_2, %c0_3] : memref<8x32xf32, #tpu.memory_space<vmem>>, vector<8x32xf32>
    tpu.vector_store %arg9[%c0_2, %c0_3], %2 {strides = array<i32>} : memref<8x32xf32, #tpu.memory_space<vmem>>, vector<8x32xf32>,
    %c0_4 = arith.constant 0 : index
    %c0_5 = arith.constant 0 : index
    %4 = vector.load %arg1[%c0_4, %c0_5] : memref<64x128xf32, #tpu.memory_space<vmem>>, vector<64x128xf32>
    %c0_6 = arith.constant 0 : index
    %c0_7 = arith.constant 0 : index
    %5 = vector.load %arg2[%c0_6, %c0_7] : memref<1x128xf32, #tpu.memory_space<vmem>>, vector<1x128xf32>
    %c0_8 = arith.constant 0 : index
    %c0_9 = arith.constant 0 : index
    %c0_10 = arith.constant 0 : index
    %6 = vector.load %arg0[%c0_8, %c0_9, %c0_10] : memref<8x8x32xf32, #tpu.memory_space<vmem>>, vector<1x8x32xf32>
    %7 = vector.shape_cast %6 : vector<1x8x32xf32> to vector<8x32xf32>
    %c0_11 = arith.constant 0 : index
    %c0_12 = arith.constant 0 : index
    %8 = vector.load %arg8[%c0_11, %c0_12] : memref<8x64xf32, #tpu.memory_space<vmem>>, vector<8x32xf32>
    tpu.vector_store %arg8[%c0_11, %c0_12], %7 {strides = array<i32>} : memref<8x64xf32, #tpu.memory_space<vmem>>, vector<8x32xf32>,
    %c0_13 = arith.constant 0 : index
    %c0_14 = arith.constant 0 : index
    %9 = vector.load %arg8[%c0_13, %c0_14] : memref<8x64xf32, #tpu.memory_space<vmem>>, vector<8x64xf32>
    %cst_15 = arith.constant dense<0.000000e+00> : vector<8x128xf32>
    %10 = tpu.matmul %9, %4, %cst_15 {dimension_numbers = #tpu.dot_dimension_numbers<[1], [0], [0], [1], [0, 0, 1, 1], [], []>} : vector<8x64xf32>, vector<64x128xf32>, vector<8x128xf32> -> vector<8x128xf32>
    %11 = vector.broadcast %5 : vector<1x128xf32> to vector<8x128xf32>
    %12 = arith.addf %10, %11 : vector<8x128xf32>
    %13 = arith.negf %12 : vector<8x128xf32>
    %14 = math.exp %13 : vector<8x128xf32>
    %cst_16 = arith.constant 1.000000e+00 : f32
    %15 = vector.broadcast %cst_16 : f32 to vector<8x128xf32>
    %16 = arith.addf %15, %14 : vector<8x128xf32>
    %17 = arith.divf %15, %16 : vector<8x128xf32>
    %18 = math.tanh %12 : vector<8x128xf32>
    %19 = vector.extract_strided_slice %17 {offsets = [0, 0], sizes = [8, 32], strides = [1, 1]} : vector<8x128xf32> to vector<8x32xf32>
    %20 = vector.extract_strided_slice %17 {offsets = [0, 32], sizes = [8, 32], strides = [1, 1]} : vector<8x128xf32> to vector<8x32xf32>
    %21 = vector.extract_strided_slice %18 {offsets = [0, 64], sizes = [8, 32], strides = [1, 1]} : vector<8x128xf32> to vector<8x32xf32>
    %22 = vector.extract_strided_slice %17 {offsets = [0, 96], sizes = [8, 32], strides = [1, 1]} : vector<8x128xf32> to vector<8x32xf32>
    %c0_17 = arith.constant 0 : index
    %c0_18 = arith.constant 0 : index
    %23 = vector.load %arg9[%c0_17, %c0_18] : memref<8x32xf32, #tpu.memory_space<vmem>>, vector<8x32xf32>
    %24 = arith.mulf %20, %23 : vector<8x32xf32>
    %25 = arith.mulf %19, %21 : vector<8x32xf32>
    %26 = arith.addf %24, %25 : vector<8x32xf32>
    %27 = math.tanh %26 : vector<8x32xf32>
    %28 = arith.mulf %22, %27 : vector<8x32xf32>
    %c0_19 = arith.constant 0 : index
    %c0_20 = arith.constant 0 : index
    %29 = vector.load %arg9[%c0_19, %c0_20] : memref<8x32xf32, #tpu.memory_space<vmem>>, vector<8x32xf32>
    tpu.vector_store %arg9[%c0_19, %c0_20], %26 {strides = array<i32>} : memref<8x32xf32, #tpu.memory_space<vmem>>, vector<8x32xf32>,
    %c0_21 = arith.constant 0 : index
    %c32 = arith.constant 32 : index
    %30 = vector.load %arg8[%c0_21, %c32] : memref<8x64xf32, #tpu.memory_space<vmem>>, vector<8x32xf32>
    tpu.vector_store %arg8[%c0_21, %c32], %28 {strides = array<i32>} : memref<8x64xf32, #tpu.memory_space<vmem>>, vector<8x32xf32>,
    %c1 = arith.constant 1 : index
    %c0_22 = arith.constant 0 : index
    %c0_23 = arith.constant 0 : index
    %31 = vector.load %arg0[%c1, %c0_22, %c0_23] : memref<8x8x32xf32, #tpu.memory_space<vmem>>, vector<1x8x32xf32>
    %32 = vector.shape_cast %31 : vector<1x8x32xf32> to vector<8x32xf32>
    %c0_24 = arith.constant 0 : index
    %c0_25 = arith.constant 0 : index
    %33 = vector.load %arg8[%c0_24, %c0_25] : memref<8x64xf32, #tpu.memory_space<vmem>>, vector<8x32xf32>
    tpu.vector_store %arg8[%c0_24, %c0_25], %32 {strides = array<i32>} : memref<8x64xf32, #tpu.memory_space<vmem>>, vector<8x32xf32>,
    %c0_26 = arith.constant 0 : index
    %c0_27 = arith.constant 0 : index
    %34 = vector.load %arg8[%c0_26, %c0_27] : memref<8x64xf32, #tpu.memory_space<vmem>>, vector<8x64xf32>
    %cst_28 = arith.constant dense<0.000000e+00> : vector<8x128xf32>
    %35 = tpu.matmul %34, %4, %cst_28 {dimension_numbers = #tpu.dot_dimension_numbers<[1], [0], [0], [1], [0, 0, 1, 1], [], []>} : vector<8x64xf32>, vector<64x128xf32>, vector<8x128xf32> -> vector<8x128xf32>
    %36 = vector.broadcast %5 : vector<1x128xf32> to vector<8x128xf32>
    %37 = arith.addf %35, %36 : vector<8x128xf32>
    %38 = arith.negf %37 : vector<8x128xf32>
    %39 = math.exp %38 : vector<8x128xf32>
    %cst_29 = arith.constant 1.000000e+00 : f32
    %40 = vector.broadcast %cst_29 : f32 to vector<8x128xf32>
    %41 = arith.addf %40, %39 : vector<8x128xf32>
    %42 = arith.divf %40, %41 : vector<8x128xf32>
    %43 = math.tanh %37 : vector<8x128xf32>
    %44 = vector.extract_strided_slice %42 {offsets = [0, 0], sizes = [8, 32], strides = [1, 1]} : vector<8x128xf32> to vector<8x32xf32>
    %45 = vector.extract_strided_slice %42 {offsets = [0, 32], sizes = [8, 32], strides = [1, 1]} : vector<8x128xf32> to vector<8x32xf32>
    %46 = vector.extract_strided_slice %43 {offsets = [0, 64], sizes = [8, 32], strides = [1, 1]} : vector<8x128xf32> to vector<8x32xf32>
    %47 = vector.extract_strided_slice %42 {offsets = [0, 96], sizes = [8, 32], strides = [1, 1]} : vector<8x128xf32> to vector<8x32xf32>
    %c0_30 = arith.constant 0 : index
    %c0_31 = arith.constant 0 : index
    %48 = vector.load %arg9[%c0_30, %c0_31] : memref<8x32xf32, #tpu.memory_space<vmem>>, vector<8x32xf32>
    %49 = arith.mulf %45, %48 : vector<8x32xf32>
    %50 = arith.mulf %44, %46 : vector<8x32xf32>
    %51 = arith.addf %49, %50 : vector<8x32xf32>
    %52 = math.tanh %51 : vector<8x32xf32>
    %53 = arith.mulf %47, %52 : vector<8x32xf32>
    %c0_32 = arith.constant 0 : index
    %c0_33 = arith.constant 0 : index
    %54 = vector.load %arg9[%c0_32, %c0_33] : memref<8x32xf32, #tpu.memory_space<vmem>>, vector<8x32xf32>
    tpu.vector_store %arg9[%c0_32, %c0_33], %51 {strides = array<i32>} : memref<8x32xf32, #tpu.memory_space<vmem>>, vector<8x32xf32>,
    %c0_34 = arith.constant 0 : index
    %c32_35 = arith.constant 32 : index
    %55 = vector.load %arg8[%c0_34, %c32_35] : memref<8x64xf32, #tpu.memory_space<vmem>>, vector<8x32xf32>
    tpu.vector_store %arg8[%c0_34, %c32_35], %53 {strides = array<i32>} : memref<8x64xf32, #tpu.memory_space<vmem>>, vector<8x32xf32>,
    %c2 = arith.constant 2 : index
    %c0_36 = arith.constant 0 : index
    %c0_37 = arith.constant 0 : index
    %56 = vector.load %arg0[%c2, %c0_36, %c0_37] : memref<8x8x32xf32, #tpu.memory_space<vmem>>, vector<1x8x32xf32>
    %57 = vector.shape_cast %56 : vector<1x8x32xf32> to vector<8x32xf32>
    %c0_38 = arith.constant 0 : index
    %c0_39 = arith.constant 0 : index
    %58 = vector.load %arg8[%c0_38, %c0_39] : memref<8x64xf32, #tpu.memory_space<vmem>>, vector<8x32xf32>
    tpu.vector_store %arg8[%c0_38, %c0_39], %57 {strides = array<i32>} : memref<8x64xf32, #tpu.memory_space<vmem>>, vector<8x32xf32>,
    %c0_40 = arith.constant 0 : index
    %c0_41 = arith.constant 0 : index
    %59 = vector.load %arg8[%c0_40, %c0_41] : memref<8x64xf32, #tpu.memory_space<vmem>>, vector<8x64xf32>
    %cst_42 = arith.constant dense<0.000000e+00> : vector<8x128xf32>
    %60 = tpu.matmul %59, %4, %cst_42 {dimension_numbers = #tpu.dot_dimension_numbers<[1], [0], [0], [1], [0, 0, 1, 1], [], []>} : vector<8x64xf32>, vector<64x128xf32>, vector<8x128xf32> -> vector<8x128xf32>
    %61 = vector.broadcast %5 : vector<1x128xf32> to vector<8x128xf32>
    %62 = arith.addf %60, %61 : vector<8x128xf32>
    %63 = arith.negf %62 : vector<8x128xf32>
    %64 = math.exp %63 : vector<8x128xf32>
    %cst_43 = arith.constant 1.000000e+00 : f32
    %65 = vector.broadcast %cst_43 : f32 to vector<8x128xf32>
    %66 = arith.addf %65, %64 : vector<8x128xf32>
    %67 = arith.divf %65, %66 : vector<8x128xf32>
    %68 = math.tanh %62 : vector<8x128xf32>
    %69 = vector.extract_strided_slice %67 {offsets = [0, 0], sizes = [8, 32], strides = [1, 1]} : vector<8x128xf32> to vector<8x32xf32>
    %70 = vector.extract_strided_slice %67 {offsets = [0, 32], sizes = [8, 32], strides = [1, 1]} : vector<8x128xf32> to vector<8x32xf32>
    %71 = vector.extract_strided_slice %68 {offsets = [0, 64], sizes = [8, 32], strides = [1, 1]} : vector<8x128xf32> to vector<8x32xf32>
    %72 = vector.extract_strided_slice %67 {offsets = [0, 96], sizes = [8, 32], strides = [1, 1]} : vector<8x128xf32> to vector<8x32xf32>
    %c0_44 = arith.constant 0 : index
    %c0_45 = arith.constant 0 : index
    %73 = vector.load %arg9[%c0_44, %c0_45] : memref<8x32xf32, #tpu.memory_space<vmem>>, vector<8x32xf32>
    %74 = arith.mulf %70, %73 : vector<8x32xf32>
    %75 = arith.mulf %69, %71 : vector<8x32xf32>
    %76 = arith.addf %74, %75 : vector<8x32xf32>
    %77 = math.tanh %76 : vector<8x32xf32>
    %78 = arith.mulf %72, %77 : vector<8x32xf32>
    %c0_46 = arith.constant 0 : index
    %c0_47 = arith.constant 0 : index
    %79 = vector.load %arg9[%c0_46, %c0_47] : memref<8x32xf32, #tpu.memory_space<vmem>>, vector<8x32xf32>
    tpu.vector_store %arg9[%c0_46, %c0_47], %76 {strides = array<i32>} : memref<8x32xf32, #tpu.memory_space<vmem>>, vector<8x32xf32>,
    %c0_48 = arith.constant 0 : index
    %c32_49 = arith.constant 32 : index
    %80 = vector.load %arg8[%c0_48, %c32_49] : memref<8x64xf32, #tpu.memory_space<vmem>>, vector<8x32xf32>
    tpu.vector_store %arg8[%c0_48, %c32_49], %78 {strides = array<i32>} : memref<8x64xf32, #tpu.memory_space<vmem>>, vector<8x32xf32>,
    %c3 = arith.constant 3 : index
    %c0_50 = arith.constant 0 : index
    %c0_51 = arith.constant 0 : index
    %81 = vector.load %arg0[%c3, %c0_50, %c0_51] : memref<8x8x32xf32, #tpu.memory_space<vmem>>, vector<1x8x32xf32>
    %82 = vector.shape_cast %81 : vector<1x8x32xf32> to vector<8x32xf32>
    %c0_52 = arith.constant 0 : index
    %c0_53 = arith.constant 0 : index
    %83 = vector.load %arg8[%c0_52, %c0_53] : memref<8x64xf32, #tpu.memory_space<vmem>>, vector<8x32xf32>
    tpu.vector_store %arg8[%c0_52, %c0_53], %82 {strides = array<i32>} : memref<8x64xf32, #tpu.memory_space<vmem>>, vector<8x32xf32>,
    %c0_54 = arith.constant 0 : index
    %c0_55 = arith.constant 0 : index
    %84 = vector.load %arg8[%c0_54, %c0_55] : memref<8x64xf32, #tpu.memory_space<vmem>>, vector<8x64xf32>
    %cst_56 = arith.constant dense<0.000000e+00> : vector<8x128xf32>
    %85 = tpu.matmul %84, %4, %cst_56 {dimension_numbers = #tpu.dot_dimension_numbers<[1], [0], [0], [1], [0, 0, 1, 1], [], []>} : vector<8x64xf32>, vector<64x128xf32>, vector<8x128xf32> -> vector<8x128xf32>
    %86 = vector.broadcast %5 : vector<1x128xf32> to vector<8x128xf32>
    %87 = arith.addf %85, %86 : vector<8x128xf32>
    %88 = arith.negf %87 : vector<8x128xf32>
    %89 = math.exp %88 : vector<8x128xf32>
    %cst_57 = arith.constant 1.000000e+00 : f32
    %90 = vector.broadcast %cst_57 : f32 to vector<8x128xf32>
    %91 = arith.addf %90, %89 : vector<8x128xf32>
    %92 = arith.divf %90, %91 : vector<8x128xf32>
    %93 = math.tanh %87 : vector<8x128xf32>
    %94 = vector.extract_strided_slice %92 {offsets = [0, 0], sizes = [8, 32], strides = [1, 1]} : vector<8x128xf32> to vector<8x32xf32>
    %95 = vector.extract_strided_slice %92 {offsets = [0, 32], sizes = [8, 32], strides = [1, 1]} : vector<8x128xf32> to vector<8x32xf32>
    %96 = vector.extract_strided_slice %93 {offsets = [0, 64], sizes = [8, 32], strides = [1, 1]} : vector<8x128xf32> to vector<8x32xf32>
    %97 = vector.extract_strided_slice %92 {offsets = [0, 96], sizes = [8, 32], strides = [1, 1]} : vector<8x128xf32> to vector<8x32xf32>
    %c0_58 = arith.constant 0 : index
    %c0_59 = arith.constant 0 : index
    %98 = vector.load %arg9[%c0_58, %c0_59] : memref<8x32xf32, #tpu.memory_space<vmem>>, vector<8x32xf32>
    %99 = arith.mulf %95, %98 : vector<8x32xf32>
    %100 = arith.mulf %94, %96 : vector<8x32xf32>
    %101 = arith.addf %99, %100 : vector<8x32xf32>
    %102 = math.tanh %101 : vector<8x32xf32>
    %103 = arith.mulf %97, %102 : vector<8x32xf32>
    %c0_60 = arith.constant 0 : index
    %c0_61 = arith.constant 0 : index
    %104 = vector.load %arg9[%c0_60, %c0_61] : memref<8x32xf32, #tpu.memory_space<vmem>>, vector<8x32xf32>
    tpu.vector_store %arg9[%c0_60, %c0_61], %101 {strides = array<i32>} : memref<8x32xf32, #tpu.memory_space<vmem>>, vector<8x32xf32>,
    %c0_62 = arith.constant 0 : index
    %c32_63 = arith.constant 32 : index
    %105 = vector.load %arg8[%c0_62, %c32_63] : memref<8x64xf32, #tpu.memory_space<vmem>>, vector<8x32xf32>
    tpu.vector_store %arg8[%c0_62, %c32_63], %103 {strides = array<i32>} : memref<8x64xf32, #tpu.memory_space<vmem>>, vector<8x32xf32>,
    %c4 = arith.constant 4 : index
    %c0_64 = arith.constant 0 : index
    %c0_65 = arith.constant 0 : index
    %106 = vector.load %arg0[%c4, %c0_64, %c0_65] : memref<8x8x32xf32, #tpu.memory_space<vmem>>, vector<1x8x32xf32>
    %107 = vector.shape_cast %106 : vector<1x8x32xf32> to vector<8x32xf32>
    %c0_66 = arith.constant 0 : index
    %c0_67 = arith.constant 0 : index
    %108 = vector.load %arg8[%c0_66, %c0_67] : memref<8x64xf32, #tpu.memory_space<vmem>>, vector<8x32xf32>
    tpu.vector_store %arg8[%c0_66, %c0_67], %107 {strides = array<i32>} : memref<8x64xf32, #tpu.memory_space<vmem>>, vector<8x32xf32>,
    %c0_68 = arith.constant 0 : index
    %c0_69 = arith.constant 0 : index
    %109 = vector.load %arg8[%c0_68, %c0_69] : memref<8x64xf32, #tpu.memory_space<vmem>>, vector<8x64xf32>
    %cst_70 = arith.constant dense<0.000000e+00> : vector<8x128xf32>
    %110 = tpu.matmul %109, %4, %cst_70 {dimension_numbers = #tpu.dot_dimension_numbers<[1], [0], [0], [1], [0, 0, 1, 1], [], []>} : vector<8x64xf32>, vector<64x128xf32>, vector<8x128xf32> -> vector<8x128xf32>
    %111 = vector.broadcast %5 : vector<1x128xf32> to vector<8x128xf32>
    %112 = arith.addf %110, %111 : vector<8x128xf32>
    %113 = arith.negf %112 : vector<8x128xf32>
    %114 = math.exp %113 : vector<8x128xf32>
    %cst_71 = arith.constant 1.000000e+00 : f32
    %115 = vector.broadcast %cst_71 : f32 to vector<8x128xf32>
    %116 = arith.addf %115, %114 : vector<8x128xf32>
    %117 = arith.divf %115, %116 : vector<8x128xf32>
    %118 = math.tanh %112 : vector<8x128xf32>
    %119 = vector.extract_strided_slice %117 {offsets = [0, 0], sizes = [8, 32], strides = [1, 1]} : vector<8x128xf32> to vector<8x32xf32>
    %120 = vector.extract_strided_slice %117 {offsets = [0, 32], sizes = [8, 32], strides = [1, 1]} : vector<8x128xf32> to vector<8x32xf32>
    %121 = vector.extract_strided_slice %118 {offsets = [0, 64], sizes = [8, 32], strides = [1, 1]} : vector<8x128xf32> to vector<8x32xf32>
    %122 = vector.extract_strided_slice %117 {offsets = [0, 96], sizes = [8, 32], strides = [1, 1]} : vector<8x128xf32> to vector<8x32xf32>
    %c0_72 = arith.constant 0 : index
    %c0_73 = arith.constant 0 : index
    %123 = vector.load %arg9[%c0_72, %c0_73] : memref<8x32xf32, #tpu.memory_space<vmem>>, vector<8x32xf32>
    %124 = arith.mulf %120, %123 : vector<8x32xf32>
    %125 = arith.mulf %119, %121 : vector<8x32xf32>
    %126 = arith.addf %124, %125 : vector<8x32xf32>
    %127 = math.tanh %126 : vector<8x32xf32>
    %128 = arith.mulf %122, %127 : vector<8x32xf32>
    %c0_74 = arith.constant 0 : index
    %c0_75 = arith.constant 0 : index
    %129 = vector.load %arg9[%c0_74, %c0_75] : memref<8x32xf32, #tpu.memory_space<vmem>>, vector<8x32xf32>
    tpu.vector_store %arg9[%c0_74, %c0_75], %126 {strides = array<i32>} : memref<8x32xf32, #tpu.memory_space<vmem>>, vector<8x32xf32>,
    %c0_76 = arith.constant 0 : index
    %c32_77 = arith.constant 32 : index
    %130 = vector.load %arg8[%c0_76, %c32_77] : memref<8x64xf32, #tpu.memory_space<vmem>>, vector<8x32xf32>
    tpu.vector_store %arg8[%c0_76, %c32_77], %128 {strides = array<i32>} : memref<8x64xf32, #tpu.memory_space<vmem>>, vector<8x32xf32>,
    %c5 = arith.constant 5 : index
    %c0_78 = arith.constant 0 : index
    %c0_79 = arith.constant 0 : index
    %131 = vector.load %arg0[%c5, %c0_78, %c0_79] : memref<8x8x32xf32, #tpu.memory_space<vmem>>, vector<1x8x32xf32>
    %132 = vector.shape_cast %131 : vector<1x8x32xf32> to vector<8x32xf32>
    %c0_80 = arith.constant 0 : index
    %c0_81 = arith.constant 0 : index
    %133 = vector.load %arg8[%c0_80, %c0_81] : memref<8x64xf32, #tpu.memory_space<vmem>>, vector<8x32xf32>
    tpu.vector_store %arg8[%c0_80, %c0_81], %132 {strides = array<i32>} : memref<8x64xf32, #tpu.memory_space<vmem>>, vector<8x32xf32>,
    %c0_82 = arith.constant 0 : index
    %c0_83 = arith.constant 0 : index
    %134 = vector.load %arg8[%c0_82, %c0_83] : memref<8x64xf32, #tpu.memory_space<vmem>>, vector<8x64xf32>
    %cst_84 = arith.constant dense<0.000000e+00> : vector<8x128xf32>
    %135 = tpu.matmul %134, %4, %cst_84 {dimension_numbers = #tpu.dot_dimension_numbers<[1], [0], [0], [1], [0, 0, 1, 1], [], []>} : vector<8x64xf32>, vector<64x128xf32>, vector<8x128xf32> -> vector<8x128xf32>
    %136 = vector.broadcast %5 : vector<1x128xf32> to vector<8x128xf32>
    %137 = arith.addf %135, %136 : vector<8x128xf32>
    %138 = arith.negf %137 : vector<8x128xf32>
    %139 = math.exp %138 : vector<8x128xf32>
    %cst_85 = arith.constant 1.000000e+00 : f32
    %140 = vector.broadcast %cst_85 : f32 to vector<8x128xf32>
    %141 = arith.addf %140, %139 : vector<8x128xf32>
    %142 = arith.divf %140, %141 : vector<8x128xf32>
    %143 = math.tanh %137 : vector<8x128xf32>
    %144 = vector.extract_strided_slice %142 {offsets = [0, 0], sizes = [8, 32], strides = [1, 1]} : vector<8x128xf32> to vector<8x32xf32>
    %145 = vector.extract_strided_slice %142 {offsets = [0, 32], sizes = [8, 32], strides = [1, 1]} : vector<8x128xf32> to vector<8x32xf32>
    %146 = vector.extract_strided_slice %143 {offsets = [0, 64], sizes = [8, 32], strides = [1, 1]} : vector<8x128xf32> to vector<8x32xf32>
    %147 = vector.extract_strided_slice %142 {offsets = [0, 96], sizes = [8, 32], strides = [1, 1]} : vector<8x128xf32> to vector<8x32xf32>
    %c0_86 = arith.constant 0 : index
    %c0_87 = arith.constant 0 : index
    %148 = vector.load %arg9[%c0_86, %c0_87] : memref<8x32xf32, #tpu.memory_space<vmem>>, vector<8x32xf32>
    %149 = arith.mulf %145, %148 : vector<8x32xf32>
    %150 = arith.mulf %144, %146 : vector<8x32xf32>
    %151 = arith.addf %149, %150 : vector<8x32xf32>
    %152 = math.tanh %151 : vector<8x32xf32>
    %153 = arith.mulf %147, %152 : vector<8x32xf32>
    %c0_88 = arith.constant 0 : index
    %c0_89 = arith.constant 0 : index
    %154 = vector.load %arg9[%c0_88, %c0_89] : memref<8x32xf32, #tpu.memory_space<vmem>>, vector<8x32xf32>
    tpu.vector_store %arg9[%c0_88, %c0_89], %151 {strides = array<i32>} : memref<8x32xf32, #tpu.memory_space<vmem>>, vector<8x32xf32>,
    %c0_90 = arith.constant 0 : index
    %c32_91 = arith.constant 32 : index
    %155 = vector.load %arg8[%c0_90, %c32_91] : memref<8x64xf32, #tpu.memory_space<vmem>>, vector<8x32xf32>
    tpu.vector_store %arg8[%c0_90, %c32_91], %153 {strides = array<i32>} : memref<8x64xf32, #tpu.memory_space<vmem>>, vector<8x32xf32>,
    %c6 = arith.constant 6 : index
    %c0_92 = arith.constant 0 : index
    %c0_93 = arith.constant 0 : index
    %156 = vector.load %arg0[%c6, %c0_92, %c0_93] : memref<8x8x32xf32, #tpu.memory_space<vmem>>, vector<1x8x32xf32>
    %157 = vector.shape_cast %156 : vector<1x8x32xf32> to vector<8x32xf32>
    %c0_94 = arith.constant 0 : index
    %c0_95 = arith.constant 0 : index
    %158 = vector.load %arg8[%c0_94, %c0_95] : memref<8x64xf32, #tpu.memory_space<vmem>>, vector<8x32xf32>
    tpu.vector_store %arg8[%c0_94, %c0_95], %157 {strides = array<i32>} : memref<8x64xf32, #tpu.memory_space<vmem>>, vector<8x32xf32>,
    %c0_96 = arith.constant 0 : index
    %c0_97 = arith.constant 0 : index
    %159 = vector.load %arg8[%c0_96, %c0_97] : memref<8x64xf32, #tpu.memory_space<vmem>>, vector<8x64xf32>
    %cst_98 = arith.constant dense<0.000000e+00> : vector<8x128xf32>
    %160 = tpu.matmul %159, %4, %cst_98 {dimension_numbers = #tpu.dot_dimension_numbers<[1], [0], [0], [1], [0, 0, 1, 1], [], []>} : vector<8x64xf32>, vector<64x128xf32>, vector<8x128xf32> -> vector<8x128xf32>
    %161 = vector.broadcast %5 : vector<1x128xf32> to vector<8x128xf32>
    %162 = arith.addf %160, %161 : vector<8x128xf32>
    %163 = arith.negf %162 : vector<8x128xf32>
    %164 = math.exp %163 : vector<8x128xf32>
    %cst_99 = arith.constant 1.000000e+00 : f32
    %165 = vector.broadcast %cst_99 : f32 to vector<8x128xf32>
    %166 = arith.addf %165, %164 : vector<8x128xf32>
    %167 = arith.divf %165, %166 : vector<8x128xf32>
    %168 = math.tanh %162 : vector<8x128xf32>
    %169 = vector.extract_strided_slice %167 {offsets = [0, 0], sizes = [8, 32], strides = [1, 1]} : vector<8x128xf32> to vector<8x32xf32>
    %170 = vector.extract_strided_slice %167 {offsets = [0, 32], sizes = [8, 32], strides = [1, 1]} : vector<8x128xf32> to vector<8x32xf32>
    %171 = vector.extract_strided_slice %168 {offsets = [0, 64], sizes = [8, 32], strides = [1, 1]} : vector<8x128xf32> to vector<8x32xf32>
    %172 = vector.extract_strided_slice %167 {offsets = [0, 96], sizes = [8, 32], strides = [1, 1]} : vector<8x128xf32> to vector<8x32xf32>
    %c0_100 = arith.constant 0 : index
    %c0_101 = arith.constant 0 : index
    %173 = vector.load %arg9[%c0_100, %c0_101] : memref<8x32xf32, #tpu.memory_space<vmem>>, vector<8x32xf32>
    %174 = arith.mulf %170, %173 : vector<8x32xf32>
    %175 = arith.mulf %169, %171 : vector<8x32xf32>
    %176 = arith.addf %174, %175 : vector<8x32xf32>
    %177 = math.tanh %176 : vector<8x32xf32>
    %178 = arith.mulf %172, %177 : vector<8x32xf32>
    %c0_102 = arith.constant 0 : index
    %c0_103 = arith.constant 0 : index
    %179 = vector.load %arg9[%c0_102, %c0_103] : memref<8x32xf32, #tpu.memory_space<vmem>>, vector<8x32xf32>
    tpu.vector_store %arg9[%c0_102, %c0_103], %176 {strides = array<i32>} : memref<8x32xf32, #tpu.memory_space<vmem>>, vector<8x32xf32>,
    %c0_104 = arith.constant 0 : index
    %c32_105 = arith.constant 32 : index
    %180 = vector.load %arg8[%c0_104, %c32_105] : memref<8x64xf32, #tpu.memory_space<vmem>>, vector<8x32xf32>
    tpu.vector_store %arg8[%c0_104, %c32_105], %178 {strides = array<i32>} : memref<8x64xf32, #tpu.memory_space<vmem>>, vector<8x32xf32>,
    %c7 = arith.constant 7 : index
    %c0_106 = arith.constant 0 : index
    %c0_107 = arith.constant 0 : index
    %181 = vector.load %arg0[%c7, %c0_106, %c0_107] : memref<8x8x32xf32, #tpu.memory_space<vmem>>, vector<1x8x32xf32>
    %182 = vector.shape_cast %181 : vector<1x8x32xf32> to vector<8x32xf32>
    %c0_108 = arith.constant 0 : index
    %c0_109 = arith.constant 0 : index
    %183 = vector.load %arg8[%c0_108, %c0_109] : memref<8x64xf32, #tpu.memory_space<vmem>>, vector<8x32xf32>
    tpu.vector_store %arg8[%c0_108, %c0_109], %182 {strides = array<i32>} : memref<8x64xf32, #tpu.memory_space<vmem>>, vector<8x32xf32>,
    %c0_110 = arith.constant 0 : index
    %c0_111 = arith.constant 0 : index
    %184 = vector.load %arg8[%c0_110, %c0_111] : memref<8x64xf32, #tpu.memory_space<vmem>>, vector<8x64xf32>
    %cst_112 = arith.constant dense<0.000000e+00> : vector<8x128xf32>
    %185 = tpu.matmul %184, %4, %cst_112 {dimension_numbers = #tpu.dot_dimension_numbers<[1], [0], [0], [1], [0, 0, 1, 1], [], []>} : vector<8x64xf32>, vector<64x128xf32>, vector<8x128xf32> -> vector<8x128xf32>
    %186 = vector.broadcast %5 : vector<1x128xf32> to vector<8x128xf32>
    %187 = arith.addf %185, %186 : vector<8x128xf32>
    %188 = arith.negf %187 : vector<8x128xf32>
    %189 = math.exp %188 : vector<8x128xf32>
    %cst_113 = arith.constant 1.000000e+00 : f32
    %190 = vector.broadcast %cst_113 : f32 to vector<8x128xf32>
    %191 = arith.addf %190, %189 : vector<8x128xf32>
    %192 = arith.divf %190, %191 : vector<8x128xf32>
    %193 = math.tanh %187 : vector<8x128xf32>
    %194 = vector.extract_strided_slice %192 {offsets = [0, 0], sizes = [8, 32], strides = [1, 1]} : vector<8x128xf32> to vector<8x32xf32>
    %195 = vector.extract_strided_slice %192 {offsets = [0, 32], sizes = [8, 32], strides = [1, 1]} : vector<8x128xf32> to vector<8x32xf32>
    %196 = vector.extract_strided_slice %193 {offsets = [0, 64], sizes = [8, 32], strides = [1, 1]} : vector<8x128xf32> to vector<8x32xf32>
    %197 = vector.extract_strided_slice %192 {offsets = [0, 96], sizes = [8, 32], strides = [1, 1]} : vector<8x128xf32> to vector<8x32xf32>
    %c0_114 = arith.constant 0 : index
    %c0_115 = arith.constant 0 : index
    %198 = vector.load %arg9[%c0_114, %c0_115] : memref<8x32xf32, #tpu.memory_space<vmem>>, vector<8x32xf32>
    %199 = arith.mulf %195, %198 : vector<8x32xf32>
    %200 = arith.mulf %194, %196 : vector<8x32xf32>
    %201 = arith.addf %199, %200 : vector<8x32xf32>
    %202 = math.tanh %201 : vector<8x32xf32>
    %203 = arith.mulf %197, %202 : vector<8x32xf32>
    %c0_116 = arith.constant 0 : index
    %c0_117 = arith.constant 0 : index
    %204 = vector.load %arg9[%c0_116, %c0_117] : memref<8x32xf32, #tpu.memory_space<vmem>>, vector<8x32xf32>
    tpu.vector_store %arg9[%c0_116, %c0_117], %201 {strides = array<i32>} : memref<8x32xf32, #tpu.memory_space<vmem>>, vector<8x32xf32>,
    %c0_118 = arith.constant 0 : index
    %c32_119 = arith.constant 32 : index
    %205 = vector.load %arg8[%c0_118, %c32_119] : memref<8x64xf32, #tpu.memory_space<vmem>>, vector<8x32xf32>
    tpu.vector_store %arg8[%c0_118, %c32_119], %203 {strides = array<i32>} : memref<8x64xf32, #tpu.memory_space<vmem>>, vector<8x32xf32>,
    %c0_120 = arith.constant 0 : index
    %c32_121 = arith.constant 32 : index
    %206 = vector.load %arg8[%c0_120, %c32_121] : memref<8x64xf32, #tpu.memory_space<vmem>>, vector<8x32xf32>
    %c0_122 = arith.constant 0 : index
    %c0_123 = arith.constant 0 : index
    %207 = vector.load %arg3[%c0_122, %c0_123] : memref<32x64xf32, #tpu.memory_space<vmem>>, vector<32x64xf32>
    %cst_124 = arith.constant dense<0.000000e+00> : vector<8x64xf32>
    %208 = tpu.matmul %206, %207, %cst_124 {dimension_numbers = #tpu.dot_dimension_numbers<[1], [0], [0], [1], [0, 0, 1, 1], [], []>} : vector<8x32xf32>, vector<32x64xf32>, vector<8x64xf32> -> vector<8x64xf32>
    %c0_125 = arith.constant 0 : index
    %c0_126 = arith.constant 0 : index
    %209 = vector.load %arg4[%c0_125, %c0_126] : memref<1x64xf32, #tpu.memory_space<vmem>>, vector<1x64xf32>
    %210 = vector.broadcast %209 : vector<1x64xf32> to vector<8x64xf32>
    %211 = arith.addf %208, %210 : vector<8x64xf32>
    %cst_127 = arith.constant 0.000000e+00 : f32
    %212 = vector.broadcast %cst_127 : f32 to vector<8x64xf32>
    %213 = arith.maximumf %211, %212 : vector<8x64xf32>
    %c0_128 = arith.constant 0 : index
    %c0_129 = arith.constant 0 : index
    %214 = vector.load %arg5[%c0_128, %c0_129] : memref<64x32xf32, #tpu.memory_space<vmem>>, vector<64x32xf32>
    %cst_130 = arith.constant dense<0.000000e+00> : vector<8x32xf32>
    %215 = tpu.matmul %213, %214, %cst_130 {dimension_numbers = #tpu.dot_dimension_numbers<[1], [0], [0], [1], [0, 0, 1, 1], [], []>} : vector<8x64xf32>, vector<64x32xf32>, vector<8x32xf32> -> vector<8x32xf32>
    %c0_131 = arith.constant 0 : index
    %c0_132 = arith.constant 0 : index
    %216 = vector.load %arg6[%c0_131, %c0_132] : memref<1x32xf32, #tpu.memory_space<vmem>>, vector<1x32xf32>
    %217 = vector.broadcast %216 : vector<1x32xf32> to vector<8x32xf32>
    %218 = arith.addf %215, %217 : vector<8x32xf32>
    %c0_133 = arith.constant 0 : index
    %c0_134 = arith.constant 0 : index
    %219 = vector.load %arg7[%c0_133, %c0_134] : memref<8x32xf32, #tpu.memory_space<vmem>>, vector<8x32xf32>
    tpu.vector_store %arg7[%c0_133, %c0_134], %218 {strides = array<i32>} : memref<8x32xf32, #tpu.memory_space<vmem>>, vector<8x32xf32>,
    return
  }
}

</mosaic_0001>

<llo_original>
// kernel: tpu_custom_call.1
$region0: #{tpu_custom_call.1}
  #allocation0 [shape = 'u32[]', space=smem, size = 0x4, offset = 0x4, fixed_abs, tag = 'smem constant byte address 0x4 - core index']
  #allocation1 [shape = 'u32[144,128]{1,0:T(1,128)}', space=vmem, size = 0x12000, scoped, tag = 'internal scratch']
  #allocation2 [shape = 'f32[8,64]{1,0:T(8,128)}', space=vmem, size = 0x1000, scoped, tag = 'scratch operand']
  #allocation3 [shape = 'f32[8,32]{1,0:T(8,128)}', space=vmem, size = 0x1000, scoped, tag = 'scratch operand']
  %s0 = inlined_call_operand.vmem [shape: f32[8,8,32], index: 0, kind: input, shape index: {}]
  %s1 = inlined_call_operand.hbm [shape: f32[64,128], index: 1, kind: input, shape index: {}]
  %s2 = inlined_call_operand.vmem [shape: f32[1,128], index: 2, kind: input, shape index: {}]
  %s3 = inlined_call_operand.vmem [shape: f32[32,64], index: 3, kind: input, shape index: {}]
  %s4 = inlined_call_operand.vmem [shape: f32[1,64], index: 4, kind: input, shape index: {}]
  %s5 = inlined_call_operand.vmem [shape: f32[64,32], index: 5, kind: input, shape index: {}]
  %s6 = inlined_call_operand.vmem [shape: f32[1,32], index: 6, kind: input, shape index: {}]
  %s7 = inlined_call_operand.hbm [shape: f32[8,32], index: 7, kind: output, shape index: {}]
  %s8 = sld [smem:[#allocation0]]
  $region42: #{tpu_custom_call.1} parent=0
    _
  %s10 = ssub.s32 1, %s8
  %s11 = scalar_select 0, %s10, %s8
  $region1: #{tpu_custom_call.1} parent=0
    #allocation4 [shape = 'u8[32768]{0}', space=vmem, size = 0x8000, scoped, tag = 'input window, operand 1, single buffered']
    #allocation5 [shape = 's32[1]{0}', space=sflag, size = 0x4, scoped, tag = 'scoped memory for tpu_custom_call.1']
    #allocation6 [shape = 's32[1]{0}', space=sflag, size = 0x4, scoped, tag = 'scoped memory for tpu_custom_call.1']
    #allocation7 [shape = 'u8[4096]{0}', space=vmem, size = 0x1000, scoped, tag = 'output window, operand 0, single buffered']
    %12 = vsyncpa [#allocation5], 0
    %13 = vsyncpa [#allocation6], 0
    // Predicated region
    $region2: #{tpu_custom_call.1} parent=1 // pred_check
      _
    $region3: #{tpu_custom_call.1} parent=1 // pred_check_branch
      %15 = sbr.rel (0) target = $region5
    $region4: #{tpu_custom_call.1} parent=1 // pred_region
      _
    $region5: #{tpu_custom_call.1} parent=1 // pred_fallthru
      _
    // Predicated region
    $region6: #{tpu_custom_call.1} parent=1 // pred_check
      _
    $region7: #{tpu_custom_call.1} parent=1 // pred_check_branch
      %17 = sbr.rel (0) target = $region9
    $region8: #{tpu_custom_call.1} parent=1 // pred_region
      %s19 = ssub.s32 1024, 1024
      %20 = vsyncadd [#allocation5], %s19
      %s21 = sshll.u32 [#allocation4], 4
      %s22 = int_to_ptr.vmem [resolvable:$true] %s21
      %27 = dma.hbm_to_vmem [thread:$0]  %s1, 1024, %s22, [#allocation5], 128, 128, 8
    $region9: #{tpu_custom_call.1} parent=1 // pred_fallthru
      _
    // Predicated region
    $region10: #{tpu_custom_call.1} parent=1 // pred_check
      _
    $region11: #{tpu_custom_call.1} parent=1 // pred_check_branch
      %29 = sbr.rel (0) target = $region13
    $region12: #{tpu_custom_call.1} parent=1 // pred_region
      _
    $region13: #{tpu_custom_call.1} parent=1 // pred_fallthru
      _
    // Predicated region
    $region14: #{tpu_custom_call.1} parent=1 // pred_check
      _
    $region15: #{tpu_custom_call.1} parent=1 // pred_check_branch
      %31 = sbr.rel (0) target = $region17
    $region16: #{tpu_custom_call.1} parent=1 // pred_region
      _
    $region17: #{tpu_custom_call.1} parent=1 // pred_fallthru
      _
    // Predicated region
    $region18: #{tpu_custom_call.1} parent=1 // pred_check
      _
    $region19: #{tpu_custom_call.1} parent=1 // pred_check_branch
      %33 = sbr.rel (0) target = $region21
    $region20: #{tpu_custom_call.1} parent=1 // pred_region
      _
    $region21: #{tpu_custom_call.1} parent=1 // pred_fallthru
      _
    // Predicated region
    $region22: #{tpu_custom_call.1} parent=1 // pred_check
      _
    $region23: #{tpu_custom_call.1} parent=1 // pred_check_branch
      %35 = sbr.rel (0) target = $region25
    $region24: #{tpu_custom_call.1} parent=1 // pred_region
      _
    $region25: #{tpu_custom_call.1} parent=1 // pred_fallthru
      _
    // Predicated region
    $region26: #{tpu_custom_call.1} parent=1 // pred_check
      _
    $region27: #{tpu_custom_call.1} parent=1 // pred_check_branch
      %37 = sbr.rel (0) target = $region29
    $region28: #{tpu_custom_call.1} parent=1 // pred_region
      _
    $region29: #{tpu_custom_call.1} parent=1 // pred_fallthru
      _
    // Predicated region
    $region30: #{tpu_custom_call.1} parent=1 // pred_check
      _
    $region31: #{tpu_custom_call.1} parent=1 // pred_check_branch
      %39 = sbr.rel (0) target = $region33
    $region32: #{tpu_custom_call.1} parent=1 // pred_region
      %40 = dma.done [#allocation5], 1024
    $region33: #{tpu_custom_call.1} parent=1 // pred_fallthru
      _
    %vm41 = vcmask 523264
    %42 = vst.msk [vmem:[#allocation2] sm:$0xff] %vm41, 0.0
    %vm43 = vcmask 261120
    %44 = vst.msk [vmem:[#allocation3] sm:$0xff] %vm43, 0.0
    %v45 = vld [vmem:[#allocation4] sm:$0xff]
    %v46 = vld [vmem:[#allocation4 + $0x8] sm:$0xff]
    %v47 = vld [vmem:[#allocation4 + $0x10] sm:$0xff]
    %v48 = vld [vmem:[#allocation4 + $0x18] sm:$0xff]
    %v49 = vld [vmem:[#allocation4 + $0x20] sm:$0xff]
    %v50 = vld [vmem:[#allocation4 + $0x28] sm:$0xff]
    %v51 = vld [vmem:[#allocation4 + $0x30] sm:$0xff]
    %v52 = vld [vmem:[#allocation4 + $0x38] sm:$0xff]
    %v53 = vld [vmem:[%s2] sm:$0x1]
    %v54 = vld [vmem:[%s0] sm:$0xff]
    %55 = vst.msk [vmem:[#allocation2] sm:$0xff] %vm43, %v54
    %v56 = vld [vmem:[#allocation2] sm:$0xff]
    %v58 = vlaneseq
    %v59 = vshrl.u32 %v58, 7
    %v60 = vsub.s32 0, %v59
    %v61 = vrot.slane %v53, %v60
    %v64 = vsel %vm41, %v56, 0
    %66 = vmatprep.subr.mxu0 0.0
    %67 = vmatpush1.msra.mxu0 0.0
    %68 = vmatprep.subr.mxu0 0.0
    %69 = vmatpush1.msra.mxu0 0.0
    %70 = vmatprep.subr.mxu0 0.0
    %71 = vmatpush1.msra.mxu0 0.0
    %72 = vmatprep.subr.mxu0 0.0
    %73 = vmatpush1.msra.mxu0 0.0
    %74 = vmatprep.subr.mxu0 0.0
    %75 = vmatpush1.msra.mxu0 0.0
    %76 = vmatprep.subr.mxu0 0.0
    %77 = vmatpush1.msra.mxu0 0.0
    %78 = vmatprep.subr.mxu0 0.0
    %79 = vmatpush1.msra.mxu0 0.0
    %80 = vmatprep.subr.mxu0 0.0
    %81 = vmatpush1.msra.mxu0 0.0
    %82 = vmatprep.subr.mxu0 0.0
    %83 = vmatpush1.msra.mxu0 %v52
    %84 = vmatprep.subr.mxu0 0.0
    %85 = vmatpush1.msra.mxu0 %v51
    %86 = vmatprep.subr.mxu0 0.0
    %87 = vmatpush1.msra.mxu0 %v50
    %88 = vmatprep.subr.mxu0 0.0
    %89 = vmatpush1.msra.mxu0 %v49
    %90 = vmatprep.subr.mxu0 0.0
    %91 = vmatpush1.msra.mxu0 %v48
    %92 = vmatprep.subr.mxu0 0.0
    %93 = vmatpush1.msra.mxu0 %v47
    %94 = vmatprep.subr.mxu0 0.0
    %95 = vmatpush1.msra.mxu0 %v46
    %96 = vmatprep.subr.mxu0 0.0
    %97 = vmatpush1.msra.mxu0 %v45
    %98 = vmatprep.subr.mxu0 0.0
    %99 = vmatpush2.msra.mxu0 0.0
    %100 = vmatprep.subr.mxu0 0.0
    %101 = vmatpush2.msra.mxu0 0.0
    %102 = vmatprep.subr.mxu0 0.0
    %103 = vmatpush2.msra.mxu0 0.0
    %104 = vmatprep.subr.mxu0 0.0
    %105 = vmatpush2.msra.mxu0 0.0
    %106 = vmatprep.subr.mxu0 0.0
    %107 = vmatpush2.msra.mxu0 0.0
    %108 = vmatprep.subr.mxu0 0.0
    %109 = vmatpush2.msra.mxu0 0.0
    %110 = vmatprep.subr.mxu0 0.0
    %111 = vmatpush2.msra.mxu0 0.0
    %112 = vmatprep.subr.mxu0 0.0
    %113 = vmatpush2.msra.mxu0 0.0
    %114 = vmatprep.subr.mxu0 0.0
    %115 = vmatpush2.msra.mxu0 0.0
    %116 = vmatprep.subr.mxu0 0.0
    %117 = vmatpush2.msra.mxu0 0.0
    %118 = vmatprep.subr.mxu0 0.0
    %119 = vmatpush2.msra.mxu0 0.0
    %120 = vmatprep.subr.mxu0 0.0
    %121 = vmatpush2.msra.mxu0 0.0
    %122 = vmatprep.subr.mxu0 0.0
    %123 = vmatpush2.msra.mxu0 0.0
    %124 = vmatprep.subr.mxu0 0.0
    %125 = vmatpush2.msra.mxu0 0.0
    %126 = vmatprep.subr.mxu0 0.0
    %127 = vmatpush2.msra.mxu0 0.0
    %128 = vmatprep.subr.mxu0 0.0
    %129 = vmatpush2.msra.mxu0 0.0
    %130 = vmatprep.mubr.f32.mxu0 0.0
    %131 = vmatmul.mubr.f32.gmra.mxu0 %v64
    %v132 = vpop.f32.mrf.mxu0
    %v133 = vadd.f32 %v61, %v132
    %v134 = vpop.f32.mrf.mxu0
    %135 = vdwg.mxu0
    %v136 = vxor.u32 %v133, 2147483648
    %v137 = vmul.f32 %v136, 1.442695
    %v138 = vpow.pop %v137
    %v139 = vadd.f32 %v138, 1.0
    %v140 = vrcp.pop %v139
    %v141 = vmul.f32 1.0, %v140
    %v142 = vtanh.pop %v133
    %v143 = vld [vmem:[#allocation3] sm:$0xff]
    %145 = vrot.lane.b32.xlu0 %v143, 32
    %v146 = vpop.permute.xlu0 %145
    %v148 = vmul.f32 %v141, %v146
    %150 = vrot.lane.b32.xlu0 %v142, 64
    %v151 = vpop.permute.xlu0 %150
    %v153 = vmul.f32 %v141, %v151
    %155 = vrot.lane.b32.xlu0 %v153, 32
    %v156 = vpop.permute.xlu0 %155
    %v158 = vadd.f32 %v148, %v156
    %v159 = vtanh.pop %v158
    %161 = vrot.lane.b32.xlu0 %v159, 64
    %v162 = vpop.permute.xlu0 %161
    %v164 = vmul.f32 %v141, %v162
    %166 = vrot.lane.b32.xlu0 %v158, 96
    %v167 = vpop.permute.xlu0 %166
    %169 = vst.msk [vmem:[#allocation3] sm:$0xff] %vm43, %v167
    %171 = vrot.lane.b32.xlu0 %v164, 64
    %v172 = vpop.permute.xlu0 %171
    %vm174 = vcmask 523520
    %175 = vst.msk [vmem:[#allocation2] sm:$0xff] %vm174, %v172
    %s176 = scalar_lea.vmem %s0, 8
    %v177 = vld [vmem:[%s176] sm:$0xff]
    %178 = vst.msk [vmem:[#allocation2] sm:$0xff] %vm43, %v177
    %v179 = vld [vmem:[#allocation2] sm:$0xff]
    %v181 = vsel %vm41, %v179, 0
    %183 = vmatprep.subr.mxu0 0.0
    %184 = vmatpush1.msra.mxu0 0.0
    %185 = vmatprep.subr.mxu0 0.0
    %186 = vmatpush1.msra.mxu0 0.0
    %187 = vmatprep.subr.mxu0 0.0
    %188 = vmatpush1.msra.mxu0 0.0
    %189 = vmatprep.subr.mxu0 0.0
    %190 = vmatpush1.msra.mxu0 0.0
    %191 = vmatprep.subr.mxu0 0.0
    %192 = vmatpush1.msra.mxu0 0.0
    %193 = vmatprep.subr.mxu0 0.0
    %194 = vmatpush1.msra.mxu0 0.0
    %195 = vmatprep.subr.mxu0 0.0
    %196 = vmatpush1.msra.mxu0 0.0
    %197 = vmatprep.subr.mxu0 0.0
    %198 = vmatpush1.msra.mxu0 0.0
    %199 = vmatprep.subr.mxu0 0.0
    %200 = vmatpush1.msra.mxu0 %v52
    %201 = vmatprep.subr.mxu0 0.0
    %202 = vmatpush1.msra.mxu0 %v51
    %203 = vmatprep.subr.mxu0 0.0
    %204 = vmatpush1.msra.mxu0 %v50
    %205 = vmatprep.subr.mxu0 0.0
    %206 = vmatpush1.msra.mxu0 %v49
    %207 = vmatprep.subr.mxu0 0.0
    %208 = vmatpush1.msra.mxu0 %v48
    %209 = vmatprep.subr.mxu0 0.0
    %210 = vmatpush1.msra.mxu0 %v47
    %211 = vmatprep.subr.mxu0 0.0
    %212 = vmatpush1.msra.mxu0 %v46
    %213 = vmatprep.subr.mxu0 0.0
    %214 = vmatpush1.msra.mxu0 %v45
    %215 = vmatprep.subr.mxu0 0.0
    %216 = vmatpush2.msra.mxu0 0.0
    %217 = vmatprep.subr.mxu0 0.0
    %218 = vmatpush2.msra.mxu0 0.0
    %219 = vmatprep.subr.mxu0 0.0
    %220 = vmatpush2.msra.mxu0 0.0
    %221 = vmatprep.subr.mxu0 0.0
    %222 = vmatpush2.msra.mxu0 0.0
    %223 = vmatprep.subr.mxu0 0.0
    %224 = vmatpush2.msra.mxu0 0.0
    %225 = vmatprep.subr.mxu0 0.0
    %226 = vmatpush2.msra.mxu0 0.0
    %227 = vmatprep.subr.mxu0 0.0
    %228 = vmatpush2.msra.mxu0 0.0
    %229 = vmatprep.subr.mxu0 0.0
    %230 = vmatpush2.msra.mxu0 0.0
    %231 = vmatprep.subr.mxu0 0.0
    %232 = vmatpush2.msra.mxu0 0.0
    %233 = vmatprep.subr.mxu0 0.0
    %234 = vmatpush2.msra.mxu0 0.0
    %235 = vmatprep.subr.mxu0 0.0
    %236 = vmatpush2.msra.mxu0 0.0
    %237 = vmatprep.subr.mxu0 0.0
    %238 = vmatpush2.msra.mxu0 0.0
    %239 = vmatprep.subr.mxu0 0.0
    %240 = vmatpush2.msra.mxu0 0.0
    %241 = vmatprep.subr.mxu0 0.0
    %242 = vmatpush2.msra.mxu0 0.0
    %243 = vmatprep.subr.mxu0 0.0
    %244 = vmatpush2.msra.mxu0 0.0
    %245 = vmatprep.subr.mxu0 0.0
    %246 = vmatpush2.msra.mxu0 0.0
    %247 = vmatprep.mubr.f32.mxu0 0.0
    %248 = vmatmul.mubr.f32.gmra.mxu0 %v181
    %v249 = vpop.f32.mrf.mxu0
    %v250 = vadd.f32 %v61, %v249
    %v251 = vpop.f32.mrf.mxu0
    %252 = vdwg.mxu0
    %v253 = vxor.u32 %v250, 2147483648
    %v254 = vmul.f32 %v253, 1.442695
    %v255 = vpow.pop %v254
    %v256 = vadd.f32 %v255, 1.0
    %v257 = vrcp.pop %v256
    %v258 = vmul.f32 1.0, %v257
    %v259 = vtanh.pop %v250
    %v260 = vld [vmem:[#allocation3] sm:$0xff]
    %262 = vrot.lane.b32.xlu0 %v260, 32
    %v263 = vpop.permute.xlu0 %262
    %v265 = vmul.f32 %v258, %v263
    %267 = vrot.lane.b32.xlu0 %v259, 64
    %v268 = vpop.permute.xlu0 %267
    %v270 = vmul.f32 %v258, %v268
    %272 = vrot.lane.b32.xlu0 %v270, 32
    %v273 = vpop.permute.xlu0 %272
    %v275 = vadd.f32 %v265, %v273
    %v276 = vtanh.pop %v275
    %278 = vrot.lane.b32.xlu0 %v276, 64
    %v279 = vpop.permute.xlu0 %278
    %v281 = vmul.f32 %v258, %v279
    %283 = vrot.lane.b32.xlu0 %v275, 96
    %v284 = vpop.permute.xlu0 %283
    %286 = vst.msk [vmem:[#allocation3] sm:$0xff] %vm43, %v284
    %288 = vrot.lane.b32.xlu0 %v281, 64
    %v289 = vpop.permute.xlu0 %288
    %291 = vst.msk [vmem:[#allocation2] sm:$0xff] %vm174, %v289
    %s292 = scalar_lea.vmem %s0, 16
    %v293 = vld [vmem:[%s292] sm:$0xff]
    %294 = vst.msk [vmem:[#allocation2] sm:$0xff] %vm43, %v293
    %v295 = vld [vmem:[#allocation2] sm:$0xff]
    %v297 = vsel %vm41, %v295, 0
    %299 = vmatprep.subr.mxu0 0.0
    %300 = vmatpush1.msra.mxu0 0.0
    %301 = vmatprep.subr.mxu0 0.0
    %302 = vmatpush1.msra.mxu0 0.0
    %303 = vmatprep.subr.mxu0 0.0
    %304 = vmatpush1.msra.mxu0 0.0
    %305 = vmatprep.subr.mxu0 0.0
    %306 = vmatpush1.msra.mxu0 0.0
    %307 = vmatprep.subr.mxu0 0.0
    %308 = vmatpush1.msra.mxu0 0.0
    %309 = vmatprep.subr.mxu0 0.0
    %310 = vmatpush1.msra.mxu0 0.0
    %311 = vmatprep.subr.mxu0 0.0
    %312 = vmatpush1.msra.mxu0 0.0
    %313 = vmatprep.subr.mxu0 0.0
    %314 = vmatpush1.msra.mxu0 0.0
    %315 = vmatprep.subr.mxu0 0.0
    %316 = vmatpush1.msra.mxu0 %v52
    %317 = vmatprep.subr.mxu0 0.0
    %318 = vmatpush1.msra.mxu0 %v51
    %319 = vmatprep.subr.mxu0 0.0
    %320 = vmatpush1.msra.mxu0 %v50
    %321 = vmatprep.subr.mxu0 0.0
    %322 = vmatpush1.msra.mxu0 %v49
    %323 = vmatprep.subr.mxu0 0.0
    %324 = vmatpush1.msra.mxu0 %v48
    %325 = vmatprep.subr.mxu0 0.0
    %326 = vmatpush1.msra.mxu0 %v47
    %327 = vmatprep.subr.mxu0 0.0
    %328 = vmatpush1.msra.mxu0 %v46
    %329 = vmatprep.subr.mxu0 0.0
    %330 = vmatpush1.msra.mxu0 %v45
    %331 = vmatprep.subr.mxu0 0.0
    %332 = vmatpush2.msra.mxu0 0.0
    %333 = vmatprep.subr.mxu0 0.0
    %334 = vmatpush2.msra.mxu0 0.0
    %335 = vmatprep.subr.mxu0 0.0
    %336 = vmatpush2.msra.mxu0 0.0
    %337 = vmatprep.subr.mxu0 0.0
    %338 = vmatpush2.msra.mxu0 0.0
    %339 = vmatprep.subr.mxu0 0.0
    %340 = vmatpush2.msra.mxu0 0.0
    %341 = vmatprep.subr.mxu0 0.0
    %342 = vmatpush2.msra.mxu0 0.0
    %343 = vmatprep.subr.mxu0 0.0
    %344 = vmatpush2.msra.mxu0 0.0
    %345 = vmatprep.subr.mxu0 0.0
    %346 = vmatpush2.msra.mxu0 0.0
    %347 = vmatprep.subr.mxu0 0.0
    %348 = vmatpush2.msra.mxu0 0.0
    %349 = vmatprep.subr.mxu0 0.0
    %350 = vmatpush2.msra.mxu0 0.0
    %351 = vmatprep.subr.mxu0 0.0
    %352 = vmatpush2.msra.mxu0 0.0
    %353 = vmatprep.subr.mxu0 0.0
    %354 = vmatpush2.msra.mxu0 0.0
    %355 = vmatprep.subr.mxu0 0.0
    %356 = vmatpush2.msra.mxu0 0.0
    %357 = vmatprep.subr.mxu0 0.0
    %358 = vmatpush2.msra.mxu0 0.0
    %359 = vmatprep.subr.mxu0 0.0
    %360 = vmatpush2.msra.mxu0 0.0
    %361 = vmatprep.subr.mxu0 0.0
    %362 = vmatpush2.msra.mxu0 0.0
    %363 = vmatprep.mubr.f32.mxu0 0.0
    %364 = vmatmul.mubr.f32.gmra.mxu0 %v297
    %v365 = vpop.f32.mrf.mxu0
    %v366 = vadd.f32 %v61, %v365
    %v367 = vpop.f32.mrf.mxu0
    %368 = vdwg.mxu0
    %v369 = vxor.u32 %v366, 2147483648
    %v370 = vmul.f32 %v369, 1.442695
    %v371 = vpow.pop %v370
    %v372 = vadd.f32 %v371, 1.0
    %v373 = vrcp.pop %v372
    %v374 = vmul.f32 1.0, %v373
    %v375 = vtanh.pop %v366
    %v376 = vld [vmem:[#allocation3] sm:$0xff]
    %378 = vrot.lane.b32.xlu0 %v376, 32
    %v379 = vpop.permute.xlu0 %378
    %v381 = vmul.f32 %v374, %v379
    %383 = vrot.lane.b32.xlu0 %v375, 64
    %v384 = vpop.permute.xlu0 %383
    %v386 = vmul.f32 %v374, %v384
    %388 = vrot.lane.b32.xlu0 %v386, 32
    %v389 = vpop.permute.xlu0 %388
    %v391 = vadd.f32 %v381, %v389
    %v392 = vtanh.pop %v391
    %394 = vrot.lane.b32.xlu0 %v392, 64
    %v395 = vpop.permute.xlu0 %394
    %v397 = vmul.f32 %v374, %v395
    %399 = vrot.lane.b32.xlu0 %v391, 96
    %v400 = vpop.permute.xlu0 %399
    %402 = vst.msk [vmem:[#allocation3] sm:$0xff] %vm43, %v400
    %404 = vrot.lane.b32.xlu0 %v397, 64
    %v405 = vpop.permute.xlu0 %404
    %407 = vst.msk [vmem:[#allocation2] sm:$0xff] %vm174, %v405
    %s408 = scalar_lea.vmem %s0, 24
    %v409 = vld [vmem:[%s408] sm:$0xff]
    %410 = vst.msk [vmem:[#allocation2] sm:$0xff] %vm43, %v409
    %v411 = vld [vmem:[#allocation2] sm:$0xff]
    %v413 = vsel %vm41, %v411, 0
    %415 = vmatprep.subr.mxu0 0.0
    %416 = vmatpush1.msra.mxu0 0.0
    %417 = vmatprep.subr.mxu0 0.0
    %418 = vmatpush1.msra.mxu0 0.0
    %419 = vmatprep.subr.mxu0 0.0
    %420 = vmatpush1.msra.mxu0 0.0
    %421 = vmatprep.subr.mxu0 0.0
    %422 = vmatpush1.msra.mxu0 0.0
    %423 = vmatprep.subr.mxu0 0.0
    %424 = vmatpush1.msra.mxu0 0.0
    %425 = vmatprep.subr.mxu0 0.0
    %426 = vmatpush1.msra.mxu0 0.0
    %427 = vmatprep.subr.mxu0 0.0
    %428 = vmatpush1.msra.mxu0 0.0
    %429 = vmatprep.subr.mxu0 0.0
    %430 = vmatpush1.msra.mxu0 0.0
    %431 = vmatprep.subr.mxu0 0.0
    %432 = vmatpush1.msra.mxu0 %v52
    %433 = vmatprep.subr.mxu0 0.0
    %434 = vmatpush1.msra.mxu0 %v51
    %435 = vmatprep.subr.mxu0 0.0
    %436 = vmatpush1.msra.mxu0 %v50
    %437 = vmatprep.subr.mxu0 0.0
    %438 = vmatpush1.msra.mxu0 %v49
    %439 = vmatprep.subr.mxu0 0.0
    %440 = vmatpush1.msra.mxu0 %v48
    %441 = vmatprep.subr.mxu0 0.0
    %442 = vmatpush1.msra.mxu0 %v47
    %443 = vmatprep.subr.mxu0 0.0
    %444 = vmatpush1.msra.mxu0 %v46
    %445 = vmatprep.subr.mxu0 0.0
    %446 = vmatpush1.msra.mxu0 %v45
    %447 = vmatprep.subr.mxu0 0.0
    %448 = vmatpush2.msra.mxu0 0.0
    %449 = vmatprep.subr.mxu0 0.0
    %450 = vmatpush2.msra.mxu0 0.0
    %451 = vmatprep.subr.mxu0 0.0
    %452 = vmatpush2.msra.mxu0 0.0
    %453 = vmatprep.subr.mxu0 0.0
    %454 = vmatpush2.msra.mxu0 0.0
    %455 = vmatprep.subr.mxu0 0.0
    %456 = vmatpush2.msra.mxu0 0.0
    %457 = vmatprep.subr.mxu0 0.0
    %458 = vmatpush2.msra.mxu0 0.0
    %459 = vmatprep.subr.mxu0 0.0
    %460 = vmatpush2.msra.mxu0 0.0
    %461 = vmatprep.subr.mxu0 0.0
    %462 = vmatpush2.msra.mxu0 0.0
    %463 = vmatprep.subr.mxu0 0.0
    %464 = vmatpush2.msra.mxu0 0.0
    %465 = vmatprep.subr.mxu0 0.0
    %466 = vmatpush2.msra.mxu0 0.0
    %467 = vmatprep.subr.mxu0 0.0
    %468 = vmatpush2.msra.mxu0 0.0
    %469 = vmatprep.subr.mxu0 0.0
    %470 = vmatpush2.msra.mxu0 0.0
    %471 = vmatprep.subr.mxu0 0.0
    %472 = vmatpush2.msra.mxu0 0.0
    %473 = vmatprep.subr.mxu0 0.0
    %474 = vmatpush2.msra.mxu0 0.0
    %475 = vmatprep.subr.mxu0 0.0
    %476 = vmatpush2.msra.mxu0 0.0
    %477 = vmatprep.subr.mxu0 0.0
    %478 = vmatpush2.msra.mxu0 0.0
    %479 = vmatprep.mubr.f32.mxu0 0.0
    %480 = vmatmul.mubr.f32.gmra.mxu0 %v413
    %v481 = vpop.f32.mrf.mxu0
    %v482 = vadd.f32 %v61, %v481
    %v483 = vpop.f32.mrf.mxu0
    %484 = vdwg.mxu0
    %v485 = vxor.u32 %v482, 2147483648
    %v486 = vmul.f32 %v485, 1.442695
    %v487 = vpow.pop %v486
    %v488 = vadd.f32 %v487, 1.0
    %v489 = vrcp.pop %v488
    %v490 = vmul.f32 1.0, %v489
    %v491 = vtanh.pop %v482
    %v492 = vld [vmem:[#allocation3] sm:$0xff]
    %494 = vrot.lane.b32.xlu0 %v492, 32
    %v495 = vpop.permute.xlu0 %494
    %v497 = vmul.f32 %v490, %v495
    %499 = vrot.lane.b32.xlu0 %v491, 64
    %v500 = vpop.permute.xlu0 %499
    %v502 = vmul.f32 %v490, %v500
    %504 = vrot.lane.b32.xlu0 %v502, 32
    %v505 = vpop.permute.xlu0 %504
    %v507 = vadd.f32 %v497, %v505
    %v508 = vtanh.pop %v507
    %510 = vrot.lane.b32.xlu0 %v508, 64
    %v511 = vpop.permute.xlu0 %510
    %v513 = vmul.f32 %v490, %v511
    %515 = vrot.lane.b32.xlu0 %v507, 96
    %v516 = vpop.permute.xlu0 %515
    %518 = vst.msk [vmem:[#allocation3] sm:$0xff] %vm43, %v516
    %520 = vrot.lane.b32.xlu0 %v513, 64
    %v521 = vpop.permute.xlu0 %520
    %523 = vst.msk [vmem:[#allocation2] sm:$0xff] %vm174, %v521
    %s524 = scalar_lea.vmem %s0, 32
    %v525 = vld [vmem:[%s524] sm:$0xff]
    %526 = vst.msk [vmem:[#allocation2] sm:$0xff] %vm43, %v525
    %v527 = vld [vmem:[#allocation2] sm:$0xff]
    %v529 = vsel %vm41, %v527, 0
    %531 = vmatprep.subr.mxu0 0.0
    %532 = vmatpush1.msra.mxu0 0.0
    %533 = vmatprep.subr.mxu0 0.0
    %534 = vmatpush1.msra.mxu0 0.0
    %535 = vmatprep.subr.mxu0 0.0
    %536 = vmatpush1.msra.mxu0 0.0
    %537 = vmatprep.subr.mxu0 0.0
    %538 = vmatpush1.msra.mxu0 0.0
    %539 = vmatprep.subr.mxu0 0.0
    %540 = vmatpush1.msra.mxu0 0.0
    %541 = vmatprep.subr.mxu0 0.0
    %542 = vmatpush1.msra.mxu0 0.0
    %543 = vmatprep.subr.mxu0 0.0
    %544 = vmatpush1.msra.mxu0 0.0
    %545 = vmatprep.subr.mxu0 0.0
    %546 = vmatpush1.msra.mxu0 0.0
    %547 = vmatprep.subr.mxu0 0.0
    %548 = vmatpush1.msra.mxu0 %v52
    %549 = vmatprep.subr.mxu0 0.0
    %550 = vmatpush1.msra.mxu0 %v51
    %551 = vmatprep.subr.mxu0 0.0
    %552 = vmatpush1.msra.mxu0 %v50
    %553 = vmatprep.subr.mxu0 0.0
    %554 = vmatpush1.msra.mxu0 %v49
    %555 = vmatprep.subr.mxu0 0.0
    %556 = vmatpush1.msra.mxu0 %v48
    %557 = vmatprep.subr.mxu0 0.0
    %558 = vmatpush1.msra.mxu0 %v47
    %559 = vmatprep.subr.mxu0 0.0
    %560 = vmatpush1.msra.mxu0 %v46
    %561 = vmatprep.subr.mxu0 0.0
    %562 = vmatpush1.msra.mxu0 %v45
    %563 = vmatprep.subr.mxu0 0.0
    %564 = vmatpush2.msra.mxu0 0.0
    %565 = vmatprep.subr.mxu0 0.0
    %566 = vmatpush2.msra.mxu0 0.0
    %567 = vmatprep.subr.mxu0 0.0
    %568 = vmatpush2.msra.mxu0 0.0
    %569 = vmatprep.subr.mxu0 0.0
    %570 = vmatpush2.msra.mxu0 0.0
    %571 = vmatprep.subr.mxu0 0.0
    %572 = vmatpush2.msra.mxu0 0.0
    %573 = vmatprep.subr.mxu0 0.0
    %574 = vmatpush2.msra.mxu0 0.0
    %575 = vmatprep.subr.mxu0 0.0
    %576 = vmatpush2.msra.mxu0 0.0
    %577 = vmatprep.subr.mxu0 0.0
    %578 = vmatpush2.msra.mxu0 0.0
    %579 = vmatprep.subr.mxu0 0.0
    %580 = vmatpush2.msra.mxu0 0.0
    %581 = vmatprep.subr.mxu0 0.0
    %582 = vmatpush2.msra.mxu0 0.0
    %583 = vmatprep.subr.mxu0 0.0
    %584 = vmatpush2.msra.mxu0 0.0
    %585 = vmatprep.subr.mxu0 0.0
    %586 = vmatpush2.msra.mxu0 0.0
    %587 = vmatprep.subr.mxu0 0.0
    %588 = vmatpush2.msra.mxu0 0.0
    %589 = vmatprep.subr.mxu0 0.0
    %590 = vmatpush2.msra.mxu0 0.0
    %591 = vmatprep.subr.mxu0 0.0
    %592 = vmatpush2.msra.mxu0 0.0
    %593 = vmatprep.subr.mxu0 0.0
    %594 = vmatpush2.msra.mxu0 0.0
    %595 = vmatprep.mubr.f32.mxu0 0.0
    %596 = vmatmul.mubr.f32.gmra.mxu0 %v529
    %v597 = vpop.f32.mrf.mxu0
    %v598 = vadd.f32 %v61, %v597
    %v599 = vpop.f32.mrf.mxu0
    %600 = vdwg.mxu0
    %v601 = vxor.u32 %v598, 2147483648
    %v602 = vmul.f32 %v601, 1.442695
    %v603 = vpow.pop %v602
    %v604 = vadd.f32 %v603, 1.0
    %v605 = vrcp.pop %v604
    %v606 = vmul.f32 1.0, %v605
    %v607 = vtanh.pop %v598
    %v608 = vld [vmem:[#allocation3] sm:$0xff]
    %610 = vrot.lane.b32.xlu0 %v608, 32
    %v611 = vpop.permute.xlu0 %610
    %v613 = vmul.f32 %v606, %v611
    %615 = vrot.lane.b32.xlu0 %v607, 64
    %v616 = vpop.permute.xlu0 %615
    %v618 = vmul.f32 %v606, %v616
    %620 = vrot.lane.b32.xlu0 %v618, 32
    %v621 = vpop.permute.xlu0 %620
    %v623 = vadd.f32 %v613, %v621
    %v624 = vtanh.pop %v623
    %626 = vrot.lane.b32.xlu0 %v624, 64
    %v627 = vpop.permute.xlu0 %626
    %v629 = vmul.f32 %v606, %v627
    %631 = vrot.lane.b32.xlu0 %v623, 96
    %v632 = vpop.permute.xlu0 %631
    %634 = vst.msk [vmem:[#allocation3] sm:$0xff] %vm43, %v632
    %636 = vrot.lane.b32.xlu0 %v629, 64
    %v637 = vpop.permute.xlu0 %636
    %639 = vst.msk [vmem:[#allocation2] sm:$0xff] %vm174, %v637
    %s640 = scalar_lea.vmem %s0, 40
    %v641 = vld [vmem:[%s640] sm:$0xff]
    %642 = vst.msk [vmem:[#allocation2] sm:$0xff] %vm43, %v641
    %v643 = vld [vmem:[#allocation2] sm:$0xff]
    %v645 = vsel %vm41, %v643, 0
    %647 = vmatprep.subr.mxu0 0.0
    %648 = vmatpush1.msra.mxu0 0.0
    %649 = vmatprep.subr.mxu0 0.0
    %650 = vmatpush1.msra.mxu0 0.0
    %651 = vmatprep.subr.mxu0 0.0
    %652 = vmatpush1.msra.mxu0 0.0
    %653 = vmatprep.subr.mxu0 0.0
    %654 = vmatpush1.msra.mxu0 0.0
    %655 = vmatprep.subr.mxu0 0.0
    %656 = vmatpush1.msra.mxu0 0.0
    %657 = vmatprep.subr.mxu0 0.0
    %658 = vmatpush1.msra.mxu0 0.0
    %659 = vmatprep.subr.mxu0 0.0
    %660 = vmatpush1.msra.mxu0 0.0
    %661 = vmatprep.subr.mxu0 0.0
    %662 = vmatpush1.msra.mxu0 0.0
    %663 = vmatprep.subr.mxu0 0.0
    %664 = vmatpush1.msra.mxu0 %v52
    %665 = vmatprep.subr.mxu0 0.0
    %666 = vmatpush1.msra.mxu0 %v51
    %667 = vmatprep.subr.mxu0 0.0
    %668 = vmatpush1.msra.mxu0 %v50
    %669 = vmatprep.subr.mxu0 0.0
    %670 = vmatpush1.msra.mxu0 %v49
    %671 = vmatprep.subr.mxu0 0.0
    %672 = vmatpush1.msra.mxu0 %v48
    %673 = vmatprep.subr.mxu0 0.0
    %674 = vmatpush1.msra.mxu0 %v47
    %675 = vmatprep.subr.mxu0 0.0
    %676 = vmatpush1.msra.mxu0 %v46
    %677 = vmatprep.subr.mxu0 0.0
    %678 = vmatpush1.msra.mxu0 %v45
    %679 = vmatprep.subr.mxu0 0.0
    %680 = vmatpush2.msra.mxu0 0.0
    %681 = vmatprep.subr.mxu0 0.0
    %682 = vmatpush2.msra.mxu0 0.0
    %683 = vmatprep.subr.mxu0 0.0
    %684 = vmatpush2.msra.mxu0 0.0
    %685 = vmatprep.subr.mxu0 0.0
    %686 = vmatpush2.msra.mxu0 0.0
    %687 = vmatprep.subr.mxu0 0.0
    %688 = vmatpush2.msra.mxu0 0.0
    %689 = vmatprep.subr.mxu0 0.0
    %690 = vmatpush2.msra.mxu0 0.0
    %691 = vmatprep.subr.mxu0 0.0
    %692 = vmatpush2.msra.mxu0 0.0
    %693 = vmatprep.subr.mxu0 0.0
    %694 = vmatpush2.msra.mxu0 0.0
    %695 = vmatprep.subr.mxu0 0.0
    %696 = vmatpush2.msra.mxu0 0.0
    %697 = vmatprep.subr.mxu0 0.0
    %698 = vmatpush2.msra.mxu0 0.0
    %699 = vmatprep.subr.mxu0 0.0
    %700 = vmatpush2.msra.mxu0 0.0
    %701 = vmatprep.subr.mxu0 0.0
    %702 = vmatpush2.msra.mxu0 0.0
    %703 = vmatprep.subr.mxu0 0.0
    %704 = vmatpush2.msra.mxu0 0.0
    %705 = vmatprep.subr.mxu0 0.0
    %706 = vmatpush2.msra.mxu0 0.0
    %707 = vmatprep.subr.mxu0 0.0
    %708 = vmatpush2.msra.mxu0 0.0
    %709 = vmatprep.subr.mxu0 0.0
    %710 = vmatpush2.msra.mxu0 0.0
    %711 = vmatprep.mubr.f32.mxu0 0.0
    %712 = vmatmul.mubr.f32.gmra.mxu0 %v645
    %v713 = vpop.f32.mrf.mxu0
    %v714 = vadd.f32 %v61, %v713
    %v715 = vpop.f32.mrf.mxu0
    %716 = vdwg.mxu0
    %v717 = vxor.u32 %v714, 2147483648
    %v718 = vmul.f32 %v717, 1.442695
    %v719 = vpow.pop %v718
    %v720 = vadd.f32 %v719, 1.0
    %v721 = vrcp.pop %v720
    %v722 = vmul.f32 1.0, %v721
    %v723 = vtanh.pop %v714
    %v724 = vld [vmem:[#allocation3] sm:$0xff]
    %726 = vrot.lane.b32.xlu0 %v724, 32
    %v727 = vpop.permute.xlu0 %726
    %v729 = vmul.f32 %v722, %v727
    %731 = vrot.lane.b32.xlu0 %v723, 64
    %v732 = vpop.permute.xlu0 %731
    %v734 = vmul.f32 %v722, %v732
    %736 = vrot.lane.b32.xlu0 %v734, 32
    %v737 = vpop.permute.xlu0 %736
    %v739 = vadd.f32 %v729, %v737
    %v740 = vtanh.pop %v739
    %742 = vrot.lane.b32.xlu0 %v740, 64
    %v743 = vpop.permute.xlu0 %742
    %v745 = vmul.f32 %v722, %v743
    %747 = vrot.lane.b32.xlu0 %v739, 96
    %v748 = vpop.permute.xlu0 %747
    %750 = vst.msk [vmem:[#allocation3] sm:$0xff] %vm43, %v748
    %752 = vrot.lane.b32.xlu0 %v745, 64
    %v753 = vpop.permute.xlu0 %752
    %755 = vst.msk [vmem:[#allocation2] sm:$0xff] %vm174, %v753
    %s756 = scalar_lea.vmem %s0, 48
    %v757 = vld [vmem:[%s756] sm:$0xff]
    %758 = vst.msk [vmem:[#allocation2] sm:$0xff] %vm43, %v757
    %v759 = vld [vmem:[#allocation2] sm:$0xff]
    %v761 = vsel %vm41, %v759, 0
    %763 = vmatprep.subr.mxu0 0.0
    %764 = vmatpush1.msra.mxu0 0.0
    %765 = vmatprep.subr.mxu0 0.0
    %766 = vmatpush1.msra.mxu0 0.0
    %767 = vmatprep.subr.mxu0 0.0
    %768 = vmatpush1.msra.mxu0 0.0
    %769 = vmatprep.subr.mxu0 0.0
    %770 = vmatpush1.msra.mxu0 0.0
    %771 = vmatprep.subr.mxu0 0.0
    %772 = vmatpush1.msra.mxu0 0.0
    %773 = vmatprep.subr.mxu0 0.0
    %774 = vmatpush1.msra.mxu0 0.0
    %775 = vmatprep.subr.mxu0 0.0
    %776 = vmatpush1.msra.mxu0 0.0
    %777 = vmatprep.subr.mxu0 0.0
    %778 = vmatpush1.msra.mxu0 0.0
    %779 = vmatprep.subr.mxu0 0.0
    %780 = vmatpush1.msra.mxu0 %v52
    %781 = vmatprep.subr.mxu0 0.0
    %782 = vmatpush1.msra.mxu0 %v51
    %783 = vmatprep.subr.mxu0 0.0
    %784 = vmatpush1.msra.mxu0 %v50
    %785 = vmatprep.subr.mxu0 0.0
    %786 = vmatpush1.msra.mxu0 %v49
    %787 = vmatprep.subr.mxu0 0.0
    %788 = vmatpush1.msra.mxu0 %v48
    %789 = vmatprep.subr.mxu0 0.0
    %790 = vmatpush1.msra.mxu0 %v47
    %791 = vmatprep.subr.mxu0 0.0
    %792 = vmatpush1.msra.mxu0 %v46
    %793 = vmatprep.subr.mxu0 0.0
    %794 = vmatpush1.msra.mxu0 %v45
    %795 = vmatprep.subr.mxu0 0.0
    %796 = vmatpush2.msra.mxu0 0.0
    %797 = vmatprep.subr.mxu0 0.0
    %798 = vmatpush2.msra.mxu0 0.0
    %799 = vmatprep.subr.mxu0 0.0
    %800 = vmatpush2.msra.mxu0 0.0
    %801 = vmatprep.subr.mxu0 0.0
    %802 = vmatpush2.msra.mxu0 0.0
    %803 = vmatprep.subr.mxu0 0.0
    %804 = vmatpush2.msra.mxu0 0.0
    %805 = vmatprep.subr.mxu0 0.0
    %806 = vmatpush2.msra.mxu0 0.0
    %807 = vmatprep.subr.mxu0 0.0
    %808 = vmatpush2.msra.mxu0 0.0
    %809 = vmatprep.subr.mxu0 0.0
    %810 = vmatpush2.msra.mxu0 0.0
    %811 = vmatprep.subr.mxu0 0.0
    %812 = vmatpush2.msra.mxu0 0.0
    %813 = vmatprep.subr.mxu0 0.0
    %814 = vmatpush2.msra.mxu0 0.0
    %815 = vmatprep.subr.mxu0 0.0
    %816 = vmatpush2.msra.mxu0 0.0
    %817 = vmatprep.subr.mxu0 0.0
    %818 = vmatpush2.msra.mxu0 0.0
    %819 = vmatprep.subr.mxu0 0.0
    %820 = vmatpush2.msra.mxu0 0.0
    %821 = vmatprep.subr.mxu0 0.0
    %822 = vmatpush2.msra.mxu0 0.0
    %823 = vmatprep.subr.mxu0 0.0
    %824 = vmatpush2.msra.mxu0 0.0
    %825 = vmatprep.subr.mxu0 0.0
    %826 = vmatpush2.msra.mxu0 0.0
    %827 = vmatprep.mubr.f32.mxu0 0.0
    %828 = vmatmul.mubr.f32.gmra.mxu0 %v761
    %v829 = vpop.f32.mrf.mxu0
    %v830 = vadd.f32 %v61, %v829
    %v831 = vpop.f32.mrf.mxu0
    %832 = vdwg.mxu0
    %v833 = vxor.u32 %v830, 2147483648
    %v834 = vmul.f32 %v833, 1.442695
    %v835 = vpow.pop %v834
    %v836 = vadd.f32 %v835, 1.0
    %v837 = vrcp.pop %v836
    %v838 = vmul.f32 1.0, %v837
    %v839 = vtanh.pop %v830
    %v840 = vld [vmem:[#allocation3] sm:$0xff]
    %842 = vrot.lane.b32.xlu0 %v840, 32
    %v843 = vpop.permute.xlu0 %842
    %v845 = vmul.f32 %v838, %v843
    %847 = vrot.lane.b32.xlu0 %v839, 64
    %v848 = vpop.permute.xlu0 %847
    %v850 = vmul.f32 %v838, %v848
    %852 = vrot.lane.b32.xlu0 %v850, 32
    %v853 = vpop.permute.xlu0 %852
    %v855 = vadd.f32 %v845, %v853
    %v856 = vtanh.pop %v855
    %858 = vrot.lane.b32.xlu0 %v856, 64
    %v859 = vpop.permute.xlu0 %858
    %v861 = vmul.f32 %v838, %v859
    %863 = vrot.lane.b32.xlu0 %v855, 96
    %v864 = vpop.permute.xlu0 %863
    %866 = vst.msk [vmem:[#allocation3] sm:$0xff] %vm43, %v864
    %868 = vrot.lane.b32.xlu0 %v861, 64
    %v869 = vpop.permute.xlu0 %868
    %871 = vst.msk [vmem:[#allocation2] sm:$0xff] %vm174, %v869
    %s872 = scalar_lea.vmem %s0, 56
    %v873 = vld [vmem:[%s872] sm:$0xff]
    %874 = vst.msk [vmem:[#allocation2] sm:$0xff] %vm43, %v873
    %v875 = vld [vmem:[#allocation2] sm:$0xff]
    %v877 = vsel %vm41, %v875, 0
    %879 = vmatprep.subr.mxu0 0.0
    %880 = vmatpush1.msra.mxu0 0.0
    %881 = vmatprep.subr.mxu0 0.0
    %882 = vmatpush1.msra.mxu0 0.0
    %883 = vmatprep.subr.mxu0 0.0
    %884 = vmatpush1.msra.mxu0 0.0
    %885 = vmatprep.subr.mxu0 0.0
    %886 = vmatpush1.msra.mxu0 0.0
    %887 = vmatprep.subr.mxu0 0.0
    %888 = vmatpush1.msra.mxu0 0.0
    %889 = vmatprep.subr.mxu0 0.0
    %890 = vmatpush1.msra.mxu0 0.0
    %891 = vmatprep.subr.mxu0 0.0
    %892 = vmatpush1.msra.mxu0 0.0
    %893 = vmatprep.subr.mxu0 0.0
    %894 = vmatpush1.msra.mxu0 0.0
    %895 = vmatprep.subr.mxu0 0.0
    %896 = vmatpush1.msra.mxu0 %v52
    %897 = vmatprep.subr.mxu0 0.0
    %898 = vmatpush1.msra.mxu0 %v51
    %899 = vmatprep.subr.mxu0 0.0
    %900 = vmatpush1.msra.mxu0 %v50
    %901 = vmatprep.subr.mxu0 0.0
    %902 = vmatpush1.msra.mxu0 %v49
    %903 = vmatprep.subr.mxu0 0.0
    %904 = vmatpush1.msra.mxu0 %v48
    %905 = vmatprep.subr.mxu0 0.0
    %906 = vmatpush1.msra.mxu0 %v47
    %907 = vmatprep.subr.mxu0 0.0
    %908 = vmatpush1.msra.mxu0 %v46
    %909 = vmatprep.subr.mxu0 0.0
    %910 = vmatpush1.msra.mxu0 %v45
    %911 = vmatprep.subr.mxu0 0.0
    %912 = vmatpush2.msra.mxu0 0.0
    %913 = vmatprep.subr.mxu0 0.0
    %914 = vmatpush2.msra.mxu0 0.0
    %915 = vmatprep.subr.mxu0 0.0
    %916 = vmatpush2.msra.mxu0 0.0
    %917 = vmatprep.subr.mxu0 0.0
    %918 = vmatpush2.msra.mxu0 0.0
    %919 = vmatprep.subr.mxu0 0.0
    %920 = vmatpush2.msra.mxu0 0.0
    %921 = vmatprep.subr.mxu0 0.0
    %922 = vmatpush2.msra.mxu0 0.0
    %923 = vmatprep.subr.mxu0 0.0
    %924 = vmatpush2.msra.mxu0 0.0
    %925 = vmatprep.subr.mxu0 0.0
    %926 = vmatpush2.msra.mxu0 0.0
    %927 = vmatprep.subr.mxu0 0.0
    %928 = vmatpush2.msra.mxu0 0.0
    %929 = vmatprep.subr.mxu0 0.0
    %930 = vmatpush2.msra.mxu0 0.0
    %931 = vmatprep.subr.mxu0 0.0
    %932 = vmatpush2.msra.mxu0 0.0
    %933 = vmatprep.subr.mxu0 0.0
    %934 = vmatpush2.msra.mxu0 0.0
    %935 = vmatprep.subr.mxu0 0.0
    %936 = vmatpush2.msra.mxu0 0.0
    %937 = vmatprep.subr.mxu0 0.0
    %938 = vmatpush2.msra.mxu0 0.0
    %939 = vmatprep.subr.mxu0 0.0
    %940 = vmatpush2.msra.mxu0 0.0
    %941 = vmatprep.subr.mxu0 0.0
    %942 = vmatpush2.msra.mxu0 0.0
    %943 = vmatprep.mubr.f32.mxu0 0.0
    %944 = vmatmul.mubr.f32.gmra.mxu0 %v877
    %v945 = vpop.f32.mrf.mxu0
    %v946 = vadd.f32 %v61, %v945
    %v947 = vpop.f32.mrf.mxu0
    %948 = vdwg.mxu0
    %v949 = vxor.u32 %v946, 2147483648
    %v950 = vmul.f32 %v949, 1.442695
    %v951 = vpow.pop %v950
    %v952 = vadd.f32 %v951, 1.0
    %v953 = vrcp.pop %v952
    %v954 = vmul.f32 1.0, %v953
    %v955 = vtanh.pop %v946
    %v956 = vld [vmem:[#allocation3] sm:$0xff]
    %958 = vrot.lane.b32.xlu0 %v956, 32
    %v959 = vpop.permute.xlu0 %958
    %v961 = vmul.f32 %v954, %v959
    %963 = vrot.lane.b32.xlu0 %v955, 64
    %v964 = vpop.permute.xlu0 %963
    %v966 = vmul.f32 %v954, %v964
    %968 = vrot.lane.b32.xlu0 %v966, 32
    %v969 = vpop.permute.xlu0 %968
    %v971 = vadd.f32 %v961, %v969
    %v972 = vtanh.pop %v971
    %974 = vrot.lane.b32.xlu0 %v972, 64
    %v975 = vpop.permute.xlu0 %974
    %v977 = vmul.f32 %v954, %v975
    %979 = vrot.lane.b32.xlu0 %v971, 96
    %v980 = vpop.permute.xlu0 %979
    %982 = vst.msk [vmem:[#allocation3] sm:$0xff] %vm43, %v980
    %984 = vrot.lane.b32.xlu0 %v977, 64
    %v985 = vpop.permute.xlu0 %984
    %987 = vst.msk [vmem:[#allocation2] sm:$0xff] %vm174, %v985
    %v988 = vld [vmem:[#allocation2] sm:$0xff]
    %v989 = vld [vmem:[%s3] sm:$0xff]
    %v990 = vld [vmem:[%s3 + $0x8] sm:$0xff]
    %v991 = vld [vmem:[%s3 + $0x10] sm:$0xff]
    %v992 = vld [vmem:[%s3 + $0x18] sm:$0xff]
    %v993 = vld [vmem:[%s4] sm:$0x1]
    %v995 = vlaneseq
    %v996 = vshrl.u32 %v995, 7
    %v997 = vsub.s32 0, %v996
    %v998 = vrot.slane %v993, %v997
    %1001 = vrot.lane.b32.xlu0 %v988, 96
    %v1002 = vpop.permute.xlu0 %1001
    %v1003 = vsel %vm43, %v1002, 0
    %1005 = vmatprep.subr.mxu0 0.0
    %1006 = vmatpush1.msra.mxu0 0.0
    %1007 = vmatprep.subr.mxu0 0.0
    %1008 = vmatpush1.msra.mxu0 0.0
    %1009 = vmatprep.subr.mxu0 0.0
    %1010 = vmatpush1.msra.mxu0 0.0
    %1011 = vmatprep.subr.mxu0 0.0
    %1012 = vmatpush1.msra.mxu0 0.0
    %1013 = vmatprep.subr.mxu0 0.0
    %1014 = vmatpush1.msra.mxu0 0.0
    %1015 = vmatprep.subr.mxu0 0.0
    %1016 = vmatpush1.msra.mxu0 0.0
    %1017 = vmatprep.subr.mxu0 0.0
    %1018 = vmatpush1.msra.mxu0 0.0
    %1019 = vmatprep.subr.mxu0 0.0
    %1020 = vmatpush1.msra.mxu0 0.0
    %1021 = vmatprep.subr.mxu0 0.0
    %1022 = vmatpush1.msra.mxu0 0.0
    %1023 = vmatprep.subr.mxu0 0.0
    %1024 = vmatpush1.msra.mxu0 0.0
    %1025 = vmatprep.subr.mxu0 0.0
    %1026 = vmatpush1.msra.mxu0 0.0
    %1027 = vmatprep.subr.mxu0 0.0
    %1028 = vmatpush1.msra.mxu0 0.0
    %1029 = vmatprep.subr.mxu0 0.0
    %1030 = vmatpush1.msra.mxu0 %v992
    %1031 = vmatprep.subr.mxu0 0.0
    %1032 = vmatpush1.msra.mxu0 %v991
    %1033 = vmatprep.subr.mxu0 0.0
    %1034 = vmatpush1.msra.mxu0 %v990
    %1035 = vmatprep.subr.mxu0 0.0
    %1036 = vmatpush1.msra.mxu0 %v989
    %1037 = vmatprep.subr.mxu0 0.0
    %1038 = vmatpush2.msra.mxu0 0.0
    %1039 = vmatprep.subr.mxu0 0.0
    %1040 = vmatpush2.msra.mxu0 0.0
    %1041 = vmatprep.subr.mxu0 0.0
    %1042 = vmatpush2.msra.mxu0 0.0
    %1043 = vmatprep.subr.mxu0 0.0
    %1044 = vmatpush2.msra.mxu0 0.0
    %1045 = vmatprep.subr.mxu0 0.0
    %1046 = vmatpush2.msra.mxu0 0.0
    %1047 = vmatprep.subr.mxu0 0.0
    %1048 = vmatpush2.msra.mxu0 0.0
    %1049 = vmatprep.subr.mxu0 0.0
    %1050 = vmatpush2.msra.mxu0 0.0
    %1051 = vmatprep.subr.mxu0 0.0
    %1052 = vmatpush2.msra.mxu0 0.0
    %1053 = vmatprep.subr.mxu0 0.0
    %1054 = vmatpush2.msra.mxu0 0.0
    %1055 = vmatprep.subr.mxu0 0.0
    %1056 = vmatpush2.msra.mxu0 0.0
    %1057 = vmatprep.subr.mxu0 0.0
    %1058 = vmatpush2.msra.mxu0 0.0
    %1059 = vmatprep.subr.mxu0 0.0
    %1060 = vmatpush2.msra.mxu0 0.0
    %1061 = vmatprep.subr.mxu0 0.0
    %1062 = vmatpush2.msra.mxu0 0.0
    %1063 = vmatprep.subr.mxu0 0.0
    %1064 = vmatpush2.msra.mxu0 0.0
    %1065 = vmatprep.subr.mxu0 0.0
    %1066 = vmatpush2.msra.mxu0 0.0
    %1067 = vmatprep.subr.mxu0 0.0
    %1068 = vmatpush2.msra.mxu0 0.0
    %1069 = vmatprep.mubr.f32.mxu0 0.0
    %1070 = vmatmul.mubr.f32.gmra.mxu0 %v1003
    %v1071 = vpop.f32.mrf.mxu0
    %v1072 = vadd.f32 %v998, %v1071
    %v1073 = vpop.f32.mrf.mxu0
    %1074 = vdwg.mxu0
    %v1075 = vmax.f32 %v1072, 0.0
    %v1076 = vld [vmem:[%s5] sm:$0xff]
    %v1077 = vld [vmem:[%s5 + $0x8] sm:$0xff]
    %v1078 = vld [vmem:[%s5 + $0x10] sm:$0xff]
    %v1079 = vld [vmem:[%s5 + $0x18] sm:$0xff]
    %v1080 = vld [vmem:[%s5 + $0x20] sm:$0xff]
    %v1081 = vld [vmem:[%s5 + $0x28] sm:$0xff]
    %v1082 = vld [vmem:[%s5 + $0x30] sm:$0xff]
    %v1083 = vld [vmem:[%s5 + $0x38] sm:$0xff]
    %v1084 = vld [vmem:[%s6] sm:$0x1]
    %v1086 = vlaneseq
    %v1087 = vshrl.u32 %v1086, 7
    %v1088 = vsub.s32 0, %v1087
    %v1089 = vrot.slane %v1084, %v1088
    %v1092 = vsel %vm41, %v1075, 0
    %1094 = vmatprep.subr.mxu0 0.0
    %1095 = vmatpush1.msra.mxu0 0.0
    %1096 = vmatprep.subr.mxu0 0.0
    %1097 = vmatpush1.msra.mxu0 0.0
    %1098 = vmatprep.subr.mxu0 0.0
    %1099 = vmatpush1.msra.mxu0 0.0
    %1100 = vmatprep.subr.mxu0 0.0
    %1101 = vmatpush1.msra.mxu0 0.0
    %1102 = vmatprep.subr.mxu0 0.0
    %1103 = vmatpush1.msra.mxu0 0.0
    %1104 = vmatprep.subr.mxu0 0.0
    %1105 = vmatpush1.msra.mxu0 0.0
    %1106 = vmatprep.subr.mxu0 0.0
    %1107 = vmatpush1.msra.mxu0 0.0
    %1108 = vmatprep.subr.mxu0 0.0
    %1109 = vmatpush1.msra.mxu0 0.0
    %1110 = vmatprep.subr.mxu0 0.0
    %1111 = vmatpush1.msra.mxu0 %v1083
    %1112 = vmatprep.subr.mxu0 0.0
    %1113 = vmatpush1.msra.mxu0 %v1082
    %1114 = vmatprep.subr.mxu0 0.0
    %1115 = vmatpush1.msra.mxu0 %v1081
    %1116 = vmatprep.subr.mxu0 0.0
    %1117 = vmatpush1.msra.mxu0 %v1080
    %1118 = vmatprep.subr.mxu0 0.0
    %1119 = vmatpush1.msra.mxu0 %v1079
    %1120 = vmatprep.subr.mxu0 0.0
    %1121 = vmatpush1.msra.mxu0 %v1078
    %1122 = vmatprep.subr.mxu0 0.0
    %1123 = vmatpush1.msra.mxu0 %v1077
    %1124 = vmatprep.subr.mxu0 0.0
    %1125 = vmatpush1.msra.mxu0 %v1076
    %1126 = vmatprep.subr.mxu0 0.0
    %1127 = vmatpush2.msra.mxu0 0.0
    %1128 = vmatprep.subr.mxu0 0.0
    %1129 = vmatpush2.msra.mxu0 0.0
    %1130 = vmatprep.subr.mxu0 0.0
    %1131 = vmatpush2.msra.mxu0 0.0
    %1132 = vmatprep.subr.mxu0 0.0
    %1133 = vmatpush2.msra.mxu0 0.0
    %1134 = vmatprep.subr.mxu0 0.0
    %1135 = vmatpush2.msra.mxu0 0.0
    %1136 = vmatprep.subr.mxu0 0.0
    %1137 = vmatpush2.msra.mxu0 0.0
    %1138 = vmatprep.subr.mxu0 0.0
    %1139 = vmatpush2.msra.mxu0 0.0
    %1140 = vmatprep.subr.mxu0 0.0
    %1141 = vmatpush2.msra.mxu0 0.0
    %1142 = vmatprep.subr.mxu0 0.0
    %1143 = vmatpush2.msra.mxu0 0.0
    %1144 = vmatprep.subr.mxu0 0.0
    %1145 = vmatpush2.msra.mxu0 0.0
    %1146 = vmatprep.subr.mxu0 0.0
    %1147 = vmatpush2.msra.mxu0 0.0
    %1148 = vmatprep.subr.mxu0 0.0
    %1149 = vmatpush2.msra.mxu0 0.0
    %1150 = vmatprep.subr.mxu0 0.0
    %1151 = vmatpush2.msra.mxu0 0.0
    %1152 = vmatprep.subr.mxu0 0.0
    %1153 = vmatpush2.msra.mxu0 0.0
    %1154 = vmatprep.subr.mxu0 0.0
    %1155 = vmatpush2.msra.mxu0 0.0
    %1156 = vmatprep.subr.mxu0 0.0
    %1157 = vmatpush2.msra.mxu0 0.0
    %1158 = vmatprep.mubr.f32.mxu0 0.0
    %1159 = vmatmul.mubr.f32.gmra.mxu0 %v1092
    %v1160 = vpop.f32.mrf.mxu0
    %v1161 = vadd.f32 %v1089, %v1160
    %v1162 = vpop.f32.mrf.mxu0
    %1163 = vdwg.mxu0
    %1164 = vst.msk [vmem:[#allocation7] sm:$0xff] %vm43, %v1161
    // Predicated region
    $region34: #{tpu_custom_call.1} parent=1 // pred_check
      _
    $region35: #{tpu_custom_call.1} parent=1 // pred_check_branch
      %1166 = sbr.rel (0) target = $region37
    $region36: #{tpu_custom_call.1} parent=1 // pred_region
      %s1168 = ssub.s32 128, 128
      %1169 = vsyncadd [#allocation6], %s1168
      %s1171 = sshll.u32 [#allocation7], 4
      %s1172 = int_to_ptr.vmem [resolvable:$true] %s1171
      %1174 = dma.vmem_to_hbm [thread:$0]  %s1172, 128, %s7, [#allocation6]
    $region37: #{tpu_custom_call.1} parent=1 // pred_fallthru
      _
    // Predicated region
    $region38: #{tpu_custom_call.1} parent=1 // pred_check
      _
    $region39: #{tpu_custom_call.1} parent=1 // pred_check_branch
      %1176 = sbr.rel (0) target = $region41
    $region40: #{tpu_custom_call.1} parent=1 // pred_region
      %1177 = dma.done [#allocation6], 128
    $region41: #{tpu_custom_call.1} parent=1 // pred_fallthru
      _
    %1178 = vsyncpa [#allocation5], 1
    %1179 = vsyncpa [#allocation6], 1

</llo_original>
